<compile_context>
chip_gen: v7x
topology: tpu7x:2x2x1
jax: 0.10.0
libtpu: 0.0.40
codegen_flags: <defaults>
</compile_context>

<pallas_src>
import functools
import numpy as np
import jax
import jax.numpy as jnp
from jax.experimental import pallas as pl
from jax.experimental.pallas import tpu as pltpu


def _round_up(x: int, m: int) -> int:
    return ((x + m - 1) // m) * m


def bicubic_weight_matrix(in_size: int, out_size: int) -> np.ndarray:
    """Dense (out_size, in_size) bicubic (a=-0.75, align_corners=False) resampling matrix."""
    a = -0.75
    W = np.zeros((out_size, in_size), dtype=np.float32)
    if out_size == in_size:
        np.fill_diagonal(W, 1.0)        # scale == 1.0 path skips the resize entirely
        return W

    def cubic(x):
        x = abs(float(x))
        if x <= 1.0:
            return (a + 2.0) * x ** 3 - (a + 3.0) * x ** 2 + 1.0
        if x < 2.0:
            return a * x ** 3 - 5.0 * a * x ** 2 + 8.0 * a * x - 4.0 * a
        return 0.0

    ratio = in_size / out_size
    for i in range(out_size):
        src = (i + 0.5) * ratio - 0.5
        i0 = int(np.floor(src))
        t = src - i0
        for k in range(-1, 3):
            idx = min(max(i0 + k, 0), in_size - 1)
            W[i, idx] += cubic(k - t)
    return W
# TODO(synk): torchvision>=0.17 defaults antialias=True for tensor inputs on downscale;
# this implements the classic antialias=False bicubic kernel.


def _resize_pad_kernel(*refs, has_fill, use_bf16, precision):
    # refs = (img_ref, wwT_ref, wh_ref, [band_ref], out_ref)
    if has_fill:
        img_ref, wwT_ref, wh_ref, band_ref, out_ref = refs
    else:
        img_ref, wwT_ref, wh_ref, out_ref = refs
        band_ref = None

    TB, Hp, W = img_ref.shape
    MS_rows, MS_lanes = out_ref.shape[1], out_ref.shape[2]

    # Stage 1: column (W -> MS_lanes) resize for all TB planes in ONE matmul.
    # Hp % 8 == 0 (wrapper pads), so the leading-dim collapse is layout-free.
    img2d = img_ref[...].reshape(TB * Hp, W)
    tmp = jnp.dot(img2d, wwT_ref[...],
                  preferred_element_type=jnp.float32,
                  precision=precision)                       # (TB*Hp, MS_lanes) f32
    tmp = tmp.reshape(TB, Hp, MS_lanes)
    if use_bf16:
        tmp = tmp.astype(jnp.bfloat16)

    # Stage 2: row (Hp -> MS_rows) resize as ONE batched contraction (wh stationary,
    # broadcast over the plane batch) -> single full-block, unmasked, lane-dense store.
    whb = jnp.broadcast_to(wh_ref[...][None], (TB, MS_rows, Hp))
    res = jnp.einsum('brh,bhl->brl', whb, tmp,
                     preferred_element_type=jnp.float32,
                     precision=precision)                    # (TB, MS_rows, MS_lanes)

    if band_ref is not None:
        # Pad band is exactly 0 from the zero-padded weights; just add the fill band.
        res = res + band_ref[...]

    out_ref[...] = res.astype(out_ref.dtype)


def _choose_tb(B: int, per_plane_bytes: int, budget_bytes: int,
               prefer_two_steps: bool, cap: int = 64) -> int:
    """Largest plane-batch per grid step that fits the VMEM budget, minimizing padded
    waste (non-divisor TB is allowed via batch padding).  On multi-TensorCore chips
    keep at least 2 grid steps so dimension_semantics=('parallel',) can shard work."""
    tb_fit = max(1, min(cap, B, budget_bytes // max(per_plane_bytes, 1)))
    if prefer_two_steps and B >= 2:
        tb_fit = min(tb_fit, (B + 1) // 2)
    best_tb, best_cost = 1, None
    for tb in range(1, tb_fit + 1):
        steps = -(-B // tb)
        cost = (steps * tb, steps)          # minimize padded planes, then step count
        if best_cost is None or cost < best_cost:
            best_tb, best_cost = tb, cost
    return best_tb


def resize_max_size(img: jax.Array, max_size: int, fill: float = 0.0,
                    use_bf16: bool = False) -> jax.Array:
    """img: (N, C, H, W) float  ->  (N, C, max_size, max_size) float32."""
    N, C, H, W = img.shape
    scale = max_size / float(max(H, W))
    if scale == 1.0:
        new_h, new_w = H, W                  # resize skipped in the torch module
    else:
        new_h, new_w = round(H * scale), round(W * scale)

    # Fast path: no resize and no pad needed -> identity.
    if new_h == H and new_w == W and H == max_size and W == max_size:
        return img.astype(jnp.float32)

    pad_h = max_size - new_h
    pad_w = max_size - new_w
    off_h = pad_h // 2                       # torchvision pad: [left, top, right, bottom]
    off_w = pad_w // 2

    Hp = _round_up(H, 8)                     # sublane-aligned input rows (layout-free collapse)
    MS_rows = _round_up(max_size, 8)         # sublane-aligned output rows
    MS_lanes = _round_up(max_size, 128)      # lane-dense output columns

    in_dtype = jnp.bfloat16 if use_bf16 else jnp.float32
    item_in = 2 if use_bf16 else 4

    # Fold centered-pad offsets into zero-padded weight matrices (pad band == 0 exactly,
    # even in bf16).  Extra zero columns in wh absorb the zero-padded image rows.
    wh_np = np.zeros((MS_rows, Hp), dtype=np.float32)
    wh_np[off_h:off_h + new_h, :H] = bicubic_weight_matrix(H, new_h)
    wwT_np = np.zeros((W, MS_lanes), dtype=np.float32)
    wwT_np[:, off_w:off_w + new_w] = bicubic_weight_matrix(W, new_w).T
    wh = jnp.asarray(wh_np, dtype=in_dtype)      # (MS_rows, Hp)
    wwT = jnp.asarray(wwT_np, dtype=in_dtype)    # (W, MS_lanes)

    has_fill = float(fill) != 0.0
    band = None
    band_size = 0
    if has_fill:
        band_np = np.full((MS_rows, MS_lanes), float(fill), dtype=np.float32)
        band_np[off_h:off_h + new_h, off_w:off_w + new_w] = 0.0
        band = jnp.asarray(band_np)
        band_size = band_np.size

    B = N * C
    img_flat = img.reshape(B, H, W).astype(in_dtype)

    # Generation-specific VMEM budget.
    MiB = 1024 * 1024
    try:
        vmem_cap = int(pltpu.get_tpu_info().vmem_capacity_bytes)
    except Exception:
        vmem_cap = 64 * MiB
    if vmem_cap > 96 * MiB:                   # v5e / v6e: 128 MiB VMEM, 1 TensorCore
        budget, vmem_limit, prefer_two = 56 * MiB, 100 * MiB, False
    else:                                     # v7x-class: 64 MiB VMEM, 2 TensorCores
        budget, vmem_limit, prefer_two = 20 * MiB, 48 * MiB, True

    # Per-plane footprint: double-buffered input & output blocks + stage-1 intermediate
    # (+ its bf16 copy) + the broadcast wh operand + the batched-dot result.
    per_plane = (2 * Hp * W * item_in
                 + 2 * MS_rows * MS_lanes * 4
                 + Hp * MS_lanes * 4
                 + (Hp * MS_lanes * 2 if use_bf16 else 0)
                 + MS_rows * Hp * item_in
                 + MS_rows * MS_lanes * 4)
    weight_bytes = 2 * (wh_np.size + wwT_np.size) * item_in + 2 * band_size * 4
    budget = max(budget - weight_bytes, per_plane)   # guarantee at least TB=1

    TB = _choose_tb(B, per_plane, budget, prefer_two)
    B_pad = _round_up(B, TB)

    needed = TB * per_plane + weight_bytes
    if needed > vmem_limit:                   # very large planes: raise limit (with headroom)
        vmem_limit = min(vmem_cap - 4 * MiB, int(needed * 1.25))

    if B_pad != B or Hp != H:
        img_flat = jnp.pad(img_flat, ((0, B_pad - B), (0, Hp - H), (0, 0)))

    in_specs = [
        pl.BlockSpec((TB, Hp, W), lambda b: (b, 0, 0)),
        pl.BlockSpec((W, MS_lanes), lambda b: (0, 0)),
        pl.BlockSpec((MS_rows, Hp), lambda b: (0, 0)),
    ]
    inputs = [img_flat, wwT, wh]
    if has_fill:
        in_specs.append(pl.BlockSpec((MS_rows, MS_lanes), lambda b: (0, 0)))
        inputs.append(band)

    kernel = functools.partial(
        _resize_pad_kernel,
        has_fill=has_fill,
        use_bf16=use_bf16,
        precision=(None if use_bf16 else jax.lax.Precision.HIGHEST))

    out_padded = pl.pallas_call(
        kernel,
        out_shape=jax.ShapeDtypeStruct((B_pad, MS_rows, MS_lanes), jnp.float32),
        grid_spec=pltpu.PrefetchScalarGridSpec(
            num_scalar_prefetch=0,
            grid=(B_pad // TB,),
            in_specs=in_specs,
            out_specs=pl.BlockSpec((TB, MS_rows, MS_lanes), lambda b: (b, 0, 0)),
        ),
        compiler_params=pltpu.CompilerParams(
            dimension_semantics=("parallel",),
            vmem_limit_bytes=vmem_limit),
    )(*inputs)

    # Slice back to the true canvas only when the padded shape differs (free when
    # max_size is already a multiple of 128 and B needed no padding).
    if B_pad != B or MS_rows != max_size or MS_lanes != max_size:
        out_padded = out_padded[:B, :max_size, :max_size]
    return out_padded.reshape(N, C, max_size, max_size)


def _reference(img, max_size, fill=0.0):
    """Plain-JAX reference: unpadded weight matrices + explicit jnp.pad."""
    N, C, H, W = img.shape
    scale = max_size / float(max(H, W))
    new_h, new_w = (H, W) if scale == 1.0 else (round(H * scale), round(W * scale))
    wh = jnp.asarray(bicubic_weight_matrix(H, new_h))
    ww = jnp.asarray(bicubic_weight_matrix(W, new_w))
    hi = jax.lax.Precision.HIGHEST
    res = jnp.einsum('oh,nchw->ncow', wh, img.astype(jnp.float32), precision=hi)
    res = jnp.einsum('pw,ncow->ncop', ww, res, precision=hi)
    pad_h, pad_w = max_size - new_h, max_size - new_w
    return jnp.pad(
        res,
        ((0, 0), (0, 0),
         (pad_h // 2, pad_h - pad_h // 2),
         (pad_w // 2, pad_w - pad_w // 2)),
        constant_values=fill)


if __name__ == "__main__":
    key = jax.random.PRNGKey(0)
    N, C, H, W = 2, 4, 16, 24       # non-square -> exercises both resize and pad
    MAX_SIZE = 16
    x = jax.random.uniform(key, (N, C, H, W), dtype=jnp.float32)

    # fill == 0 path (zeros fall out of the zero-padded weights)
    out0 = jax.block_until_ready(resize_max_size(x, MAX_SIZE, fill=0.0))
    ref0 = _reference(x, MAX_SIZE, fill=0.0)
    assert out0.shape == (N, C, MAX_SIZE, MAX_SIZE), out0.shape
    np.testing.assert_allclose(np.asarray(out0), np.asarray(ref0), rtol=1e-5, atol=1e-5)

    # non-zero fill path (precomputed fill-band input added in-kernel)
    out1 = jax.block_until_ready(resize_max_size(x, MAX_SIZE, fill=1.5))
    ref1 = _reference(x, MAX_SIZE, fill=1.5)
    np.testing.assert_allclose(np.asarray(out1), np.asarray(ref1), rtol=1e-5, atol=1e-5)

    # bf16 MXU mode (v5e-friendly); looser tolerance.
    out2 = jax.block_until_ready(resize_max_size(x, MAX_SIZE, fill=0.0, use_bf16=True))
    np.testing.assert_allclose(np.asarray(out2), np.asarray(ref0), rtol=0.0, atol=4e-2)

    # H not a multiple of 8 -> exercises the zero-row / zero-column layout padding.
    x3 = jax.random.uniform(jax.random.PRNGKey(1), (1, 3, 12, 20), dtype=jnp.float32)
    out3 = jax.block_until_ready(resize_max_size(x3, MAX_SIZE, fill=0.0))
    ref3 = _reference(x3, MAX_SIZE, fill=0.0)
    np.testing.assert_allclose(np.asarray(out3), np.asarray(ref3), rtol=1e-5, atol=1e-5)

    print("KERNEL_OK")
</pallas_src>

<mosaic_0001>
module attributes {stable_mosaic.version = 11 : i64} {
  func.func @_resize_pad_kernel(%arg0: i32, %arg1: memref<4x16x24xf32, #tpu.memory_space<vmem>>, %arg2: memref<24x128xf32, #tpu.memory_space<vmem>>, %arg3: memref<16x16xf32, #tpu.memory_space<vmem>>, %arg4: memref<4x16x128xf32, #tpu.memory_space<vmem>>) attributes {dimension_semantics = [#tpu.dimension_semantics<parallel>], iteration_bounds = array<i64: 2>, scalar_prefetch = 0 : i64, scratch_operands = 0 : i64, tpu.core_type = #tpu.core_type<tc>, window_params = [{transform_indices = @transform_0, window_bounds = array<i64: 4, 16, 24>}, {pipeline_mode = #tpu.pipeline_mode<synchronous>, transform_indices = @transform_1, window_bounds = array<i64: 24, 128>}, {pipeline_mode = #tpu.pipeline_mode<synchronous>, transform_indices = @transform_2, window_bounds = array<i64: 16, 16>}, {transform_indices = @transform_3, window_bounds = array<i64: 4, 16, 128>}]} {
    %c0 = arith.constant 0 : index
    %c0_0 = arith.constant 0 : index
    %c0_1 = arith.constant 0 : index
    %0 = vector.load %arg1[%c0, %c0_0, %c0_1] : memref<4x16x24xf32, #tpu.memory_space<vmem>>, vector<4x16x24xf32>
    %1 = vector.shape_cast %0 : vector<4x16x24xf32> to vector<64x24xf32>
    %c0_2 = arith.constant 0 : index
    %c0_3 = arith.constant 0 : index
    %2 = vector.load %arg2[%c0_2, %c0_3] : memref<24x128xf32, #tpu.memory_space<vmem>>, vector<24x128xf32>
    %cst = arith.constant dense<0.000000e+00> : vector<64x128xf32>
    %3 = tpu.matmul %1, %2, %cst {dimension_numbers = #tpu.dot_dimension_numbers<[1], [0], [0], [1], [0, 0, 1, 1], [], []>, precision = #tpu.contract_precision<fp32>} : vector<64x24xf32>, vector<24x128xf32>, vector<64x128xf32> -> vector<64x128xf32>
    %4 = vector.shape_cast %3 : vector<64x128xf32> to vector<4x16x128xf32>
    %c0_4 = arith.constant 0 : index
    %c0_5 = arith.constant 0 : index
    %5 = vector.load %arg3[%c0_4, %c0_5] : memref<16x16xf32, #tpu.memory_space<vmem>>, vector<16x16xf32>
    %6 = vector.shape_cast %5 : vector<16x16xf32> to vector<1x16x16xf32>
    %7 = vector.shape_cast %6 : vector<1x16x16xf32> to vector<1x16x16xf32>
    %8 = vector.broadcast %7 : vector<1x16x16xf32> to vector<4x16x16xf32>
    "tpu.trace_start"() <{level = 10 : i32, message = "brh,bhl->brl"}> : () -> ()
    %cst_6 = arith.constant dense<0.000000e+00> : vector<4x16x128xf32>
    %9 = tpu.matmul %8, %4, %cst_6 {dimension_numbers = #tpu.dot_dimension_numbers<[2], [1], [1], [2], [0, 0, 0, 1, 1, 2], [0], [0]>, precision = #tpu.contract_precision<fp32>} : vector<4x16x16xf32>, vector<4x16x128xf32>, vector<4x16x128xf32> -> vector<4x16x128xf32>
    "tpu.trace_stop"() : () -> ()
    %c0_7 = arith.constant 0 : index
    %c0_8 = arith.constant 0 : index
    %c0_9 = arith.constant 0 : index
    %10 = vector.load %arg4[%c0_7, %c0_8, %c0_9] : memref<4x16x128xf32, #tpu.memory_space<vmem>>, vector<4x16x128xf32>
    tpu.vector_store %arg4[%c0_7, %c0_8, %c0_9], %9 {strides = array<i32>} : memref<4x16x128xf32, #tpu.memory_space<vmem>>, vector<4x16x128xf32>,
    return
  }
  func.func @transform_0(%arg0: i32) -> (i32, i32, i32) {
    %c0_i32 = arith.constant 0 : i32
    %c0_i32_0 = arith.constant 0 : i32
    %c0_i32_1 = arith.constant 0 : i32
    return %arg0, %c0_i32, %c0_i32_0 : i32, i32, i32
  }
  func.func @transform_1(%arg0: i32) -> (i32, i32) {
    %c0_i32 = arith.constant 0 : i32
    %c0_i32_0 = arith.constant 0 : i32
    %c0_i32_1 = arith.constant 0 : i32
    return %c0_i32, %c0_i32_0 : i32, i32
  }
  func.func @transform_2(%arg0: i32) -> (i32, i32) {
    %c0_i32 = arith.constant 0 : i32
    %c0_i32_0 = arith.constant 0 : i32
    %c0_i32_1 = arith.constant 0 : i32
    return %c0_i32, %c0_i32_0 : i32, i32
  }
  func.func @transform_3(%arg0: i32) -> (i32, i32, i32) {
    %c0_i32 = arith.constant 0 : i32
    %c0_i32_0 = arith.constant 0 : i32
    %c0_i32_1 = arith.constant 0 : i32
    return %arg0, %c0_i32, %c0_i32_0 : i32, i32, i32
  }
}

</mosaic_0001>

<llo_original>
// kernel: tpu_custom_call.1
$region0: #{tpu_custom_call.1}
  #allocation0 [shape = 'u32[]', space=smem, size = 0x4, offset = 0x4, fixed_abs, tag = 'smem constant byte address 0x4 - core index']
  #allocation1 [shape = 'u32[144,128]{1,0:T(1,128)}', space=vmem, size = 0x12000, scoped, tag = 'internal scratch']
  %s0 = inlined_call_operand.hbm [shape: f32[8,16,24], index: 0, kind: input, shape index: {}]
  %s1 = inlined_call_operand.hbm [shape: f32[24,128], index: 1, kind: input, shape index: {}]
  %s2 = inlined_call_operand.hbm [shape: f32[16,16], index: 2, kind: input, shape index: {}]
  %s3 = inlined_call_operand.hbm [shape: f32[8,16,128], index: 3, kind: output, shape index: {}]
  %s4 = sld [smem:[#allocation0]]
  $region57: #{tpu_custom_call.1} parent=0
    _
  %s6 = ssub.s32 1, %s4
  %s7 = scalar_select 0, %s6, %s4
  $region1: #{tpu_custom_call.1} parent=0
    #allocation2 [shape = 'u8[65536]{0}', space=vmem, size = 0x10000, scoped, tag = 'input window, operand 0']
    #allocation3 [shape = 's32[2]{0}', space=sflag, size = 0x8, scoped, tag = 'scoped memory for tpu_custom_call.1']
    #allocation4 [shape = 's32[2]{0}', space=sflag, size = 0x8, scoped, tag = 'scoped memory for tpu_custom_call.1']
    #allocation5 [shape = 'u8[12288]{0}', space=vmem, size = 0x3000, scoped, tag = 'input window, operand 1, single buffered']
    #allocation6 [shape = 's32[1]{0}', space=sflag, size = 0x4, scoped, tag = 'scoped memory for tpu_custom_call.1']
    #allocation7 [shape = 'u8[8192]{0}', space=vmem, size = 0x2000, scoped, tag = 'input window, operand 2, single buffered']
    #allocation8 [shape = 'u8[65536]{0}', space=vmem, size = 0x10000, scoped, tag = 'output window, operand 0']
    %8 = vsyncpa [#allocation3], 0
    %s9 = scalar_lea.sflag [#allocation3], 1
    %10 = vsyncpa %s9, 0
    %11 = vsyncpa [#allocation6], 0
    %12 = vsyncpa [#allocation4], 0
    %s13 = scalar_lea.sflag [#allocation4], 1
    %14 = vsyncpa %s13, 0
    loop: start=0, step=1, limit=4
    $region2: #{tpu_custom_call.1} parent=1 // loop_pre_header
      _
    $region3: #{tpu_custom_call.1} parent=1 // loop_header
      %s16 = sphi 0, %s20
      %p17 = scmp.ge.s32.totalorder %s16, 4
      %s26 = sphi 0, %s28
      %s29 = sphi 0, %s26
      %s30 = sphi 0, %s29
      %s46 = sphi 0, %s30
      %s50 = sphi 0, %s50
      %s52 = sphi 0, %s50
      %s53 = sphi 0, %s52
      %s67 = sphi 0, %s53
      %s71 = sphi 0, %s71
      %s73 = sphi 0, %s71
      %s74 = sphi 0, %s73
      %s88 = sphi 0, %s74
      %s94 = sphi 0, %s96
      %s97 = sphi 0, %s94
      %s98 = sphi 0, %s97
      %s114 = sphi 0, %s98
    $region4: #{tpu_custom_call.1} parent=1 // loop_header_branch
      %19 = sbr.rel (%p17) target = $region8
    $region5: #{tpu_custom_call.1} parent=1 // loop_body
      %s21 = ssub.s32 %s16, 1
      %s22 = ssub.s32 %s16, 2
      %s23 = sadd.s32 %s16, 1
      %s24 = ssub.s32 %s16, %s23
      %p25 = scmp.eq.s32.totalorder %s24, 0
      %s27 = sadd.s32 %s26, 1
      %s28 = scalar_select %p25, %s26, %s27
      %p31 = pneg %p25
      %p32 = scmp.eq.s32.totalorder %s16, 1
      %p33 = por %p31, %p32
      %p34 = scmp.ne.s32.totalorder %s26, %s29
      %p35 = scmp.eq.s32.totalorder %s16, 0
      %p36 = por %p34, %p35
      %p37 = scmp.ne.s32.totalorder %s26, %s29
      %p38 = scmp.eq.s32.totalorder %s21, 1
      %p39 = por %p37, %p38
      %p40 = scmp.ne.s32.totalorder %s29, %s30
      %p41 = scmp.eq.s32.totalorder %s21, 0
      %p42 = por %p40, %p41
      %p43 = scmp.ne.s32.totalorder %s29, %s30
      %p44 = scmp.eq.s32.totalorder %s22, 1
      %p45 = por %p43, %p44
      %p47 = scmp.ne.s32.totalorder %s30, %s46
      %p48 = scmp.eq.s32.totalorder %s22, 0
      %p49 = por %p47, %p48
      %s51 = sadd.s32 %s50, 1
      %p54 = scmp.eq.s32.totalorder %s16, 1
      %p55 = scmp.ne.s32.totalorder %s50, %s52
      %p56 = scmp.eq.s32.totalorder %s16, 0
      %p57 = por %p55, %p56
      %p58 = scmp.ne.s32.totalorder %s50, %s52
      %p59 = scmp.eq.s32.totalorder %s21, 1
      %p60 = por %p58, %p59
      %p61 = scmp.ne.s32.totalorder %s52, %s53
      %p62 = scmp.eq.s32.totalorder %s21, 0
      %p63 = por %p61, %p62
      %p64 = scmp.ne.s32.totalorder %s52, %s53
      %p65 = scmp.eq.s32.totalorder %s22, 1
      %p66 = por %p64, %p65
      %p68 = scmp.ne.s32.totalorder %s53, %s67
      %p69 = scmp.eq.s32.totalorder %s22, 0
      %p70 = por %p68, %p69
      %s72 = sadd.s32 %s71, 1
      %p75 = scmp.eq.s32.totalorder %s16, 1
      %p76 = scmp.ne.s32.totalorder %s71, %s73
      %p77 = scmp.eq.s32.totalorder %s16, 0
      %p78 = por %p76, %p77
      %p79 = scmp.ne.s32.totalorder %s71, %s73
      %p80 = scmp.eq.s32.totalorder %s21, 1
      %p81 = por %p79, %p80
      %p82 = scmp.ne.s32.totalorder %s73, %s74
      %p83 = scmp.eq.s32.totalorder %s21, 0
      %p84 = por %p82, %p83
      %p85 = scmp.ne.s32.totalorder %s73, %s74
      %p86 = scmp.eq.s32.totalorder %s22, 1
      %p87 = por %p85, %p86
      %p89 = scmp.ne.s32.totalorder %s74, %s88
      %p90 = scmp.eq.s32.totalorder %s22, 0
      %p91 = por %p89, %p90
      %s92 = ssub.s32 %s16, %s23
      %p93 = scmp.eq.s32.totalorder %s92, 0
      %s95 = sadd.s32 %s94, 1
      %s96 = scalar_select %p93, %s94, %s95
      %p99 = pneg %p93
      %p100 = scmp.eq.s32.totalorder %s16, 1
      %p101 = por %p99, %p100
      %p102 = scmp.ne.s32.totalorder %s94, %s97
      %p103 = scmp.eq.s32.totalorder %s16, 0
      %p104 = por %p102, %p103
      %p105 = scmp.ne.s32.totalorder %s94, %s97
      %p106 = scmp.eq.s32.totalorder %s21, 1
      %p107 = por %p105, %p106
      %p108 = scmp.ne.s32.totalorder %s97, %s98
      %p109 = scmp.eq.s32.totalorder %s21, 0
      %p110 = por %p108, %p109
      %p111 = scmp.ne.s32.totalorder %s97, %s98
      %p112 = scmp.eq.s32.totalorder %s22, 1
      %p113 = por %p111, %p112
      %p115 = scmp.ne.s32.totalorder %s98, %s114
      %p116 = scmp.eq.s32.totalorder %s22, 0
      %p117 = por %p115, %p116
      %p118 = scmp.le.s32.totalorder 1, %s16
      %p119 = scmp.lt.s32.totalorder %s16, 3
      %p120 = pnand %p118, %p119
      %p121 = pneg %p120
      // Predicated region
      $region9: #{tpu_custom_call.1} parent=5 // pred_check
        _
      $region10: #{tpu_custom_call.1} parent=5 // pred_check_branch
        %123 = sbr.rel (%p120) target = $region12
      $region11: #{tpu_custom_call.1} parent=5 // pred_region
        %s124 = ssub.s32 %s16, 1
        // Predicated region
        $region13: #{tpu_custom_call.1} parent=11 // pred_check
          %p125 = pneg %p63
        $region14: #{tpu_custom_call.1} parent=11 // pred_check_branch
          %127 = sbr.rel (%p125) target = $region16
        $region15: #{tpu_custom_call.1} parent=11 // pred_region
          %s129 = ssub.s32 384, 384
          %130 = vsyncadd [#allocation6], %s129
          %s131 = sshll.u32 [#allocation5], 4
          %s132 = int_to_ptr.vmem [resolvable:$true] %s131
          %137 = dma.hbm_to_vmem [thread:$0]  %s1, 384, %s132, [#allocation6], 128, 128, 8
        $region16: #{tpu_custom_call.1} parent=11 // pred_fallthru
          _
        // Predicated region
        $region17: #{tpu_custom_call.1} parent=11 // pred_check
          %p138 = pneg %p84
        $region18: #{tpu_custom_call.1} parent=11 // pred_check_branch
          %140 = sbr.rel (%p138) target = $region20
        $region19: #{tpu_custom_call.1} parent=11 // pred_region
          %s142 = ssub.s32 256, 256
          %143 = vsyncadd [#allocation6], %s142
          %s144 = sshll.u32 [#allocation7], 4
          %s145 = int_to_ptr.vmem [resolvable:$true] %s144
          %150 = dma.hbm_to_vmem [thread:$0]  %s2, 256, %s145, [#allocation6], 128, 128, 8
        $region20: #{tpu_custom_call.1} parent=11 // pred_fallthru
          _
      $region12: #{tpu_custom_call.1} parent=5 // pred_fallthru
        _
      %p151 = scmp.lt.s32.totalorder %s16, 2
      // Predicated region
      $region21: #{tpu_custom_call.1} parent=5 // pred_check
        %p152 = pneg %p151
      $region22: #{tpu_custom_call.1} parent=5 // pred_check_branch
        %154 = sbr.rel (%p152) target = $region24
      $region23: #{tpu_custom_call.1} parent=5 // pred_region
        // Predicated region
        $region25: #{tpu_custom_call.1} parent=23 // pred_check
          %p155 = pneg %p36
        $region26: #{tpu_custom_call.1} parent=23 // pred_check_branch
          %157 = sbr.rel (%p155) target = $region28
        $region27: #{tpu_custom_call.1} parent=23 // pred_region
          %s158 = sand.u32 %s26, 1
          %s159 = scalar_lea.sflag [#allocation3], %s158
          %s160 = sand.u32 %s26, 1
          %s161 = smul.addr %s160, 64
          %s162 = scalar_lea.vmem [#allocation2], %s161
          %s163 = smul.u32 4, %s16
          %s165 = ssub.s32 1024, 1024
          %166 = vsyncadd %s159, %s165
          %s167 = smul.addr %s163, 2
          %s168 = smul.addr %s167, 128
          %s169 = scalar_lea.hbm %s0, %s168
          %s170 = sshll.u32 %s162, 4
          %s171 = int_to_ptr.vmem [resolvable:$true] %s170
          %176 = dma.hbm_to_vmem [thread:$0]  %s169, 1024, %s171, %s159, 128, 128, 8
        $region28: #{tpu_custom_call.1} parent=23 // pred_fallthru
          _
      $region24: #{tpu_custom_call.1} parent=5 // pred_fallthru
        _
      %p177 = scmp.le.s32.totalorder 1, %s16
      %p178 = scmp.lt.s32.totalorder %s16, 3
      %p179 = pnand %p177, %p178
      %p180 = pneg %p179
      // Predicated region
      $region29: #{tpu_custom_call.1} parent=5 // pred_check
        _
      $region30: #{tpu_custom_call.1} parent=5 // pred_check_branch
        %182 = sbr.rel (%p179) target = $region32
      $region31: #{tpu_custom_call.1} parent=5 // pred_region
        %s183 = ssub.s32 %s16, 1
        %s184 = sand.u32 %s29, 1
        %s185 = scalar_lea.sflag [#allocation3], %s184
        %s186 = sand.u32 %s29, 1
        %s187 = smul.addr %s186, 64
        %s188 = scalar_lea.vmem [#allocation2], %s187
        // Predicated region
        $region33: #{tpu_custom_call.1} parent=31 // pred_check
          %p189 = pneg %p42
        $region34: #{tpu_custom_call.1} parent=31 // pred_check_branch
          %191 = sbr.rel (%p189) target = $region36
        $region35: #{tpu_custom_call.1} parent=31 // pred_region
          %192 = dma.done %s185, 1024
        $region36: #{tpu_custom_call.1} parent=31 // pred_fallthru
          _
        // Predicated region
        $region37: #{tpu_custom_call.1} parent=31 // pred_check
          %p193 = pneg %p63
        $region38: #{tpu_custom_call.1} parent=31 // pred_check_branch
          %195 = sbr.rel (%p193) target = $region40
        $region39: #{tpu_custom_call.1} parent=31 // pred_region
          %196 = dma.done [#allocation6], 384
        $region40: #{tpu_custom_call.1} parent=31 // pred_fallthru
          _
        // Predicated region
        $region41: #{tpu_custom_call.1} parent=31 // pred_check
          %p197 = pneg %p84
        $region42: #{tpu_custom_call.1} parent=31 // pred_check_branch
          %199 = sbr.rel (%p197) target = $region44
        $region43: #{tpu_custom_call.1} parent=31 // pred_region
          %200 = dma.done [#allocation6], 256
        $region44: #{tpu_custom_call.1} parent=31 // pred_fallthru
          _
        %s201 = sand.u32 %s29, 1
        %s202 = scalar_lea.sflag [#allocation3], %s201
        %s203 = sand.u32 %s29, 1
        %s204 = smul.addr %s203, 64
        %s205 = scalar_lea.vmem [#allocation2], %s204
        %p206 = pneg %p42
        %p207 = pneg %p39
        %p208 = pneg %p63
        %p209 = pneg %p60
        %p210 = pneg %p84
        %p211 = pneg %p81
        %p212 = pneg %p110
        %p213 = pneg %p107
        %s214 = sand.u32 %s97, 1
        %s215 = scalar_lea.sflag [#allocation4], %s214
        %s216 = sand.u32 %s97, 1
        %s217 = smul.addr %s216, 64
        %s218 = scalar_lea.vmem [#allocation8], %s217
        %s219 = smul.u32 4, %s21
        %s220 = smul.u32 4, %s21
        %v221 = vld [vmem:[%s188] sm:$0xff]
        %v222 = vld [vmem:[%s188 + $0x8] sm:$0xff]
        %v223 = vld [vmem:[%s188 + $0x10] sm:$0xff]
        %v224 = vld [vmem:[%s188 + $0x18] sm:$0xff]
        %v225 = vld [vmem:[%s188 + $0x20] sm:$0xff]
        %v226 = vld [vmem:[%s188 + $0x28] sm:$0xff]
        %v227 = vld [vmem:[%s188 + $0x30] sm:$0xff]
        %v228 = vld [vmem:[%s188 + $0x38] sm:$0xff]
        %v229 = vld [vmem:[#allocation5] sm:$0xff]
        %v230 = vld [vmem:[#allocation5 + $0x8] sm:$0xff]
        %v231 = vld [vmem:[#allocation5 + $0x10] sm:$0xff]
        %vm232 = vcmask 195584
        %v234 = vsel %vm232, %v221, 0
        %v237 = vsel %vm232, %v222, 0
        %v240 = vsel %vm232, %v223, 0
        %v243 = vsel %vm232, %v224, 0
        %v246 = vsel %vm232, %v225, 0
        %v249 = vsel %vm232, %v226, 0
        %v252 = vsel %vm232, %v227, 0
        %v255 = vsel %vm232, %v228, 0
        %257 = vmatprep.subr.mxu0 0.0
        %v258 = vand.u32 %v229, 4294901760
        %259 = vmatpush1.msra.mxu0 %v258
        %260 = vmatprep.subr.mxu0 0.0
        %v261 = vand.u32 %v230, 4294901760
        %262 = vmatpush1.msra.mxu0 %v261
        %263 = vmatprep.subr.mxu0 0.0
        %v264 = vand.u32 %v231, 4294901760
        %265 = vmatpush1.msra.mxu0 %v264
        %266 = vmatprep.subr.mxu0 0.0
        %267 = vmatpush1.msra.mxu0 0.0
        %268 = vmatprep.subr.mxu0 0.0
        %269 = vmatpush1.msra.mxu0 0.0
        %270 = vmatprep.subr.mxu0 0.0
        %271 = vmatpush1.msra.mxu0 0.0
        %272 = vmatprep.subr.mxu0 0.0
        %273 = vmatpush1.msra.mxu0 0.0
        %274 = vmatprep.subr.mxu0 0.0
        %275 = vmatpush1.msra.mxu0 0.0
        %276 = vmatprep.subr.mxu0 0.0
        %277 = vmatpush1.msra.mxu0 0.0
        %278 = vmatprep.subr.mxu0 0.0
        %279 = vmatpush1.msra.mxu0 0.0
        %280 = vmatprep.subr.mxu0 0.0
        %281 = vmatpush1.msra.mxu0 0.0
        %282 = vmatprep.subr.mxu0 0.0
        %283 = vmatpush1.msra.mxu0 0.0
        %284 = vmatprep.subr.mxu0 0.0
        %285 = vmatpush1.msra.mxu0 0.0
        %286 = vmatprep.subr.mxu0 0.0
        %287 = vmatpush1.msra.mxu0 0.0
        %288 = vmatprep.subr.mxu0 0.0
        %289 = vmatpush1.msra.mxu0 0.0
        %290 = vmatprep.subr.mxu0 0.0
        %291 = vmatpush1.msra.mxu0 0.0
        %292 = vmatprep.subr.mxu0 0.0
        %293 = vmatpush1.msra.mxu0 0.0
        %294 = vmatprep.subr.mxu0 0.0
        %295 = vmatpush1.msra.mxu0 0.0
        %296 = vmatprep.subr.mxu0 0.0
        %297 = vmatpush1.msra.mxu0 0.0
        %298 = vmatprep.subr.mxu0 0.0
        %299 = vmatpush1.msra.mxu0 0.0
        %300 = vmatprep.subr.mxu0 0.0
        %301 = vmatpush1.msra.mxu0 0.0
        %302 = vmatprep.subr.mxu0 0.0
        %303 = vmatpush1.msra.mxu0 0.0
        %304 = vmatprep.subr.mxu0 0.0
        %305 = vmatpush1.msra.mxu0 0.0
        %306 = vmatprep.subr.mxu0 0.0
        %307 = vmatpush1.msra.mxu0 0.0
        %308 = vmatprep.subr.mxu0 0.0
        %309 = vmatpush1.msra.mxu0 0.0
        %310 = vmatprep.subr.mxu0 0.0
        %311 = vmatpush1.msra.mxu0 0.0
        %312 = vmatprep.subr.mxu0 0.0
        %313 = vmatpush1.msra.mxu0 0.0
        %314 = vmatprep.subr.mxu0 0.0
        %315 = vmatpush1.msra.mxu0 0.0
        %316 = vmatprep.subr.mxu0 0.0
        %317 = vmatpush1.msra.mxu0 0.0
        %318 = vmatprep.subr.mxu0 0.0
        %319 = vmatpush1.msra.mxu0 0.0
        %320 = vmatprep.subr.mxu0 0.0
        %321 = vmatpush1.msra.mxu0 0.0
        %322 = vmatprep.subr.mxu0 0.0
        %323 = vmatpush1.msra.mxu0 0.0
        %324 = vmatprep.mubr.f32.mxu0 0.0
        %v325 = vand.u32 %v234, 4294901760
        %v326 = vsub.f32 %v234, %v325
        %v327 = vand.u32 %v326, 4294901760
        %v328 = vsub.f32 %v326, %v327
        %v329 = vand.u32 %v328, 4294901760
        %330 = vmatmul.mubr.f32.gmra.mrb[0].mxu0 %v329
        %v331 = vpop.f32.mrb[0].mxu0
        %v332 = vadd.f32 0.0, %v331
        %v333 = vpop.f32.mrb[0].mxu0
        %334 = vmatprep.mubr.f32.mxu0 0.0
        %v335 = vand.u32 %v237, 4294901760
        %v336 = vsub.f32 %v237, %v335
        %v337 = vand.u32 %v336, 4294901760
        %v338 = vsub.f32 %v336, %v337
        %v339 = vand.u32 %v338, 4294901760
        %340 = vmatmul.mubr.f32.gmra.mrb[0].mxu0 %v339
        %v341 = vpop.f32.mrb[0].mxu0
        %v342 = vadd.f32 0.0, %v341
        %v343 = vpop.f32.mrb[0].mxu0
        %344 = vmatprep.mubr.f32.mxu0 0.0
        %v345 = vand.u32 %v240, 4294901760
        %v346 = vsub.f32 %v240, %v345
        %v347 = vand.u32 %v346, 4294901760
        %v348 = vsub.f32 %v346, %v347
        %v349 = vand.u32 %v348, 4294901760
        %350 = vmatmul.mubr.f32.gmra.mrb[0].mxu0 %v349
        %v351 = vpop.f32.mrb[0].mxu0
        %v352 = vadd.f32 0.0, %v351
        %v353 = vpop.f32.mrb[0].mxu0
        %354 = vmatprep.mubr.f32.mxu0 0.0
        %v355 = vand.u32 %v243, 4294901760
        %v356 = vsub.f32 %v243, %v355
        %v357 = vand.u32 %v356, 4294901760
        %v358 = vsub.f32 %v356, %v357
        %v359 = vand.u32 %v358, 4294901760
        %360 = vmatmul.mubr.f32.gmra.mrb[0].mxu0 %v359
        %v361 = vpop.f32.mrb[0].mxu0
        %v362 = vadd.f32 0.0, %v361
        %v363 = vpop.f32.mrb[0].mxu0
        %364 = vmatprep.mubr.f32.mxu0 0.0
        %v365 = vand.u32 %v246, 4294901760
        %v366 = vsub.f32 %v246, %v365
        %v367 = vand.u32 %v366, 4294901760
        %v368 = vsub.f32 %v366, %v367
        %v369 = vand.u32 %v368, 4294901760
        %370 = vmatmul.mubr.f32.gmra.mrb[0].mxu0 %v369
        %v371 = vpop.f32.mrb[0].mxu0
        %v372 = vadd.f32 0.0, %v371
        %v373 = vpop.f32.mrb[0].mxu0
        %374 = vmatprep.mubr.f32.mxu0 0.0
        %v375 = vand.u32 %v249, 4294901760
        %v376 = vsub.f32 %v249, %v375
        %v377 = vand.u32 %v376, 4294901760
        %v378 = vsub.f32 %v376, %v377
        %v379 = vand.u32 %v378, 4294901760
        %380 = vmatmul.mubr.f32.gmra.mrb[0].mxu0 %v379
        %v381 = vpop.f32.mrb[0].mxu0
        %v382 = vadd.f32 0.0, %v381
        %v383 = vpop.f32.mrb[0].mxu0
        %384 = vmatprep.mubr.f32.mxu0 0.0
        %v385 = vand.u32 %v252, 4294901760
        %v386 = vsub.f32 %v252, %v385
        %v387 = vand.u32 %v386, 4294901760
        %v388 = vsub.f32 %v386, %v387
        %v389 = vand.u32 %v388, 4294901760
        %390 = vmatmul.mubr.f32.gmra.mrb[0].mxu0 %v389
        %v391 = vpop.f32.mrb[0].mxu0
        %v392 = vadd.f32 0.0, %v391
        %v393 = vpop.f32.mrb[0].mxu0
        %394 = vmatprep.mubr.f32.mxu0 0.0
        %v395 = vand.u32 %v255, 4294901760
        %v396 = vsub.f32 %v255, %v395
        %v397 = vand.u32 %v396, 4294901760
        %v398 = vsub.f32 %v396, %v397
        %v399 = vand.u32 %v398, 4294901760
        %400 = vmatmul.mubr.f32.gmra.mrb[0].mxu0 %v399
        %v401 = vpop.f32.mrb[0].mxu0
        %v402 = vadd.f32 0.0, %v401
        %v403 = vpop.f32.mrb[0].mxu0
        %404 = vdwg.mxu0
        %405 = vmatprep.subr.mxu0 0.0
        %v406 = vand.u32 %v229, 4294901760
        %v407 = vsub.f32 %v229, %v406
        %v408 = vand.u32 %v407, 4294901760
        %v409 = vsub.f32 %v407, %v408
        %v410 = vand.u32 %v409, 4294901760
        %411 = vmatpush1.msra.mxu0 %v410
        %412 = vmatprep.subr.mxu0 0.0
        %v413 = vand.u32 %v230, 4294901760
        %v414 = vsub.f32 %v230, %v413
        %v415 = vand.u32 %v414, 4294901760
        %v416 = vsub.f32 %v414, %v415
        %v417 = vand.u32 %v416, 4294901760
        %418 = vmatpush1.msra.mxu0 %v417
        %419 = vmatprep.subr.mxu0 0.0
        %v420 = vand.u32 %v231, 4294901760
        %v421 = vsub.f32 %v231, %v420
        %v422 = vand.u32 %v421, 4294901760
        %v423 = vsub.f32 %v421, %v422
        %v424 = vand.u32 %v423, 4294901760
        %425 = vmatpush1.msra.mxu0 %v424
        %426 = vmatprep.subr.mxu0 0.0
        %427 = vmatpush1.msra.mxu0 0.0
        %428 = vmatprep.subr.mxu0 0.0
        %429 = vmatpush1.msra.mxu0 0.0
        %430 = vmatprep.subr.mxu0 0.0
        %431 = vmatpush1.msra.mxu0 0.0
        %432 = vmatprep.subr.mxu0 0.0
        %433 = vmatpush1.msra.mxu0 0.0
        %434 = vmatprep.subr.mxu0 0.0
        %435 = vmatpush1.msra.mxu0 0.0
        %436 = vmatprep.subr.mxu0 0.0
        %437 = vmatpush1.msra.mxu0 0.0
        %438 = vmatprep.subr.mxu0 0.0
        %439 = vmatpush1.msra.mxu0 0.0
        %440 = vmatprep.subr.mxu0 0.0
        %441 = vmatpush1.msra.mxu0 0.0
        %442 = vmatprep.subr.mxu0 0.0
        %443 = vmatpush1.msra.mxu0 0.0
        %444 = vmatprep.subr.mxu0 0.0
        %445 = vmatpush1.msra.mxu0 0.0
        %446 = vmatprep.subr.mxu0 0.0
        %447 = vmatpush1.msra.mxu0 0.0
        %448 = vmatprep.subr.mxu0 0.0
        %449 = vmatpush1.msra.mxu0 0.0
        %450 = vmatprep.subr.mxu0 0.0
        %451 = vmatpush1.msra.mxu0 0.0
        %452 = vmatprep.subr.mxu0 0.0
        %453 = vmatpush1.msra.mxu0 0.0
        %454 = vmatprep.subr.mxu0 0.0
        %455 = vmatpush1.msra.mxu0 0.0
        %456 = vmatprep.subr.mxu0 0.0
        %457 = vmatpush1.msra.mxu0 0.0
        %458 = vmatprep.subr.mxu0 0.0
        %459 = vmatpush1.msra.mxu0 0.0
        %460 = vmatprep.subr.mxu0 0.0
        %461 = vmatpush1.msra.mxu0 0.0
        %462 = vmatprep.subr.mxu0 0.0
        %463 = vmatpush1.msra.mxu0 0.0
        %464 = vmatprep.subr.mxu0 0.0
        %465 = vmatpush1.msra.mxu0 0.0
        %466 = vmatprep.subr.mxu0 0.0
        %467 = vmatpush1.msra.mxu0 0.0
        %468 = vmatprep.subr.mxu0 0.0
        %469 = vmatpush1.msra.mxu0 0.0
        %470 = vmatprep.subr.mxu0 0.0
        %471 = vmatpush1.msra.mxu0 0.0
        %472 = vmatprep.subr.mxu0 0.0
        %473 = vmatpush1.msra.mxu0 0.0
        %474 = vmatprep.subr.mxu0 0.0
        %475 = vmatpush1.msra.mxu0 0.0
        %476 = vmatprep.subr.mxu0 0.0
        %477 = vmatpush1.msra.mxu0 0.0
        %478 = vmatprep.subr.mxu0 0.0
        %479 = vmatpush1.msra.mxu0 0.0
        %480 = vmatprep.subr.mxu0 0.0
        %481 = vmatpush1.msra.mxu0 0.0
        %482 = vmatprep.subr.mxu0 0.0
        %483 = vmatpush1.msra.mxu0 0.0
        %484 = vmatprep.mubr.f32.mxu0 0.0
        %v485 = vand.u32 %v234, 4294901760
        %486 = vmatmul.mubr.f32.gmra.mrb[0].mxu0 %v485
        %v487 = vpop.f32.mrb[0].mxu0
        %v488 = vadd.f32 %v332, %v487
        %v489 = vpop.f32.mrb[0].mxu0
        %490 = vmatprep.mubr.f32.mxu0 0.0
        %v491 = vand.u32 %v237, 4294901760
        %492 = vmatmul.mubr.f32.gmra.mrb[0].mxu0 %v491
        %v493 = vpop.f32.mrb[0].mxu0
        %v494 = vadd.f32 %v342, %v493
        %v495 = vpop.f32.mrb[0].mxu0
        %496 = vmatprep.mubr.f32.mxu0 0.0
        %v497 = vand.u32 %v240, 4294901760
        %498 = vmatmul.mubr.f32.gmra.mrb[0].mxu0 %v497
        %v499 = vpop.f32.mrb[0].mxu0
        %v500 = vadd.f32 %v352, %v499
        %v501 = vpop.f32.mrb[0].mxu0
        %502 = vmatprep.mubr.f32.mxu0 0.0
        %v503 = vand.u32 %v243, 4294901760
        %504 = vmatmul.mubr.f32.gmra.mrb[0].mxu0 %v503
        %v505 = vpop.f32.mrb[0].mxu0
        %v506 = vadd.f32 %v362, %v505
        %v507 = vpop.f32.mrb[0].mxu0
        %508 = vmatprep.mubr.f32.mxu0 0.0
        %v509 = vand.u32 %v246, 4294901760
        %510 = vmatmul.mubr.f32.gmra.mrb[0].mxu0 %v509
        %v511 = vpop.f32.mrb[0].mxu0
        %v512 = vadd.f32 %v372, %v511
        %v513 = vpop.f32.mrb[0].mxu0
        %514 = vmatprep.mubr.f32.mxu0 0.0
        %v515 = vand.u32 %v249, 4294901760
        %516 = vmatmul.mubr.f32.gmra.mrb[0].mxu0 %v515
        %v517 = vpop.f32.mrb[0].mxu0
        %v518 = vadd.f32 %v382, %v517
        %v519 = vpop.f32.mrb[0].mxu0
        %520 = vmatprep.mubr.f32.mxu0 0.0
        %v521 = vand.u32 %v252, 4294901760
        %522 = vmatmul.mubr.f32.gmra.mrb[0].mxu0 %v521
        %v523 = vpop.f32.mrb[0].mxu0
        %v524 = vadd.f32 %v392, %v523
        %v525 = vpop.f32.mrb[0].mxu0
        %526 = vmatprep.mubr.f32.mxu0 0.0
        %v527 = vand.u32 %v255, 4294901760
        %528 = vmatmul.mubr.f32.gmra.mrb[0].mxu0 %v527
        %v529 = vpop.f32.mrb[0].mxu0
        %v530 = vadd.f32 %v402, %v529
        %v531 = vpop.f32.mrb[0].mxu0
        %532 = vdwg.mxu0
        %533 = vmatprep.subr.mxu0 0.0
        %v534 = vand.u32 %v229, 4294901760
        %v535 = vsub.f32 %v229, %v534
        %536 = vmatpush1.msra.mxu0 %v535
        %537 = vmatprep.subr.mxu0 0.0
        %v538 = vand.u32 %v230, 4294901760
        %v539 = vsub.f32 %v230, %v538
        %540 = vmatpush1.msra.mxu0 %v539
        %541 = vmatprep.subr.mxu0 0.0
        %v542 = vand.u32 %v231, 4294901760
        %v543 = vsub.f32 %v231, %v542
        %544 = vmatpush1.msra.mxu0 %v543
        %545 = vmatprep.subr.mxu0 0.0
        %546 = vmatpush1.msra.mxu0 0.0
        %547 = vmatprep.subr.mxu0 0.0
        %548 = vmatpush1.msra.mxu0 0.0
        %549 = vmatprep.subr.mxu0 0.0
        %550 = vmatpush1.msra.mxu0 0.0
        %551 = vmatprep.subr.mxu0 0.0
        %552 = vmatpush1.msra.mxu0 0.0
        %553 = vmatprep.subr.mxu0 0.0
        %554 = vmatpush1.msra.mxu0 0.0
        %555 = vmatprep.subr.mxu0 0.0
        %556 = vmatpush1.msra.mxu0 0.0
        %557 = vmatprep.subr.mxu0 0.0
        %558 = vmatpush1.msra.mxu0 0.0
        %559 = vmatprep.subr.mxu0 0.0
        %560 = vmatpush1.msra.mxu0 0.0
        %561 = vmatprep.subr.mxu0 0.0
        %562 = vmatpush1.msra.mxu0 0.0
        %563 = vmatprep.subr.mxu0 0.0
        %564 = vmatpush1.msra.mxu0 0.0
        %565 = vmatprep.subr.mxu0 0.0
        %566 = vmatpush1.msra.mxu0 0.0
        %567 = vmatprep.subr.mxu0 0.0
        %568 = vmatpush1.msra.mxu0 0.0
        %569 = vmatprep.subr.mxu0 0.0
        %570 = vmatpush1.msra.mxu0 0.0
        %571 = vmatprep.subr.mxu0 0.0
        %572 = vmatpush1.msra.mxu0 0.0
        %573 = vmatprep.subr.mxu0 0.0
        %574 = vmatpush1.msra.mxu0 0.0
        %575 = vmatprep.subr.mxu0 0.0
        %576 = vmatpush1.msra.mxu0 0.0
        %577 = vmatprep.subr.mxu0 0.0
        %578 = vmatpush1.msra.mxu0 0.0
        %579 = vmatprep.subr.mxu0 0.0
        %580 = vmatpush1.msra.mxu0 0.0
        %581 = vmatprep.subr.mxu0 0.0
        %582 = vmatpush1.msra.mxu0 0.0
        %583 = vmatprep.subr.mxu0 0.0
        %584 = vmatpush1.msra.mxu0 0.0
        %585 = vmatprep.subr.mxu0 0.0
        %586 = vmatpush1.msra.mxu0 0.0
        %587 = vmatprep.subr.mxu0 0.0
        %588 = vmatpush1.msra.mxu0 0.0
        %589 = vmatprep.subr.mxu0 0.0
        %590 = vmatpush1.msra.mxu0 0.0
        %591 = vmatprep.subr.mxu0 0.0
        %592 = vmatpush1.msra.mxu0 0.0
        %593 = vmatprep.subr.mxu0 0.0
        %594 = vmatpush1.msra.mxu0 0.0
        %595 = vmatprep.subr.mxu0 0.0
        %596 = vmatpush1.msra.mxu0 0.0
        %597 = vmatprep.subr.mxu0 0.0
        %598 = vmatpush1.msra.mxu0 0.0
        %599 = vmatprep.subr.mxu0 0.0
        %600 = vmatpush1.msra.mxu0 0.0
        %601 = vmatprep.subr.mxu0 0.0
        %602 = vmatpush1.msra.mxu0 0.0
        %603 = vmatprep.mubr.f32.mxu0 0.0
        %v604 = vand.u32 %v234, 4294901760
        %v605 = vsub.f32 %v234, %v604
        %606 = vmatmul.mubr.f32.gmra.mrb[0].mxu0 %v605
        %v607 = vpop.f32.mrb[0].mxu0
        %v608 = vadd.f32 %v488, %v607
        %v609 = vpop.f32.mrb[0].mxu0
        %610 = vmatprep.mubr.f32.mxu0 0.0
        %v611 = vand.u32 %v237, 4294901760
        %v612 = vsub.f32 %v237, %v611
        %613 = vmatmul.mubr.f32.gmra.mrb[0].mxu0 %v612
        %v614 = vpop.f32.mrb[0].mxu0
        %v615 = vadd.f32 %v494, %v614
        %v616 = vpop.f32.mrb[0].mxu0
        %617 = vmatprep.mubr.f32.mxu0 0.0
        %v618 = vand.u32 %v240, 4294901760
        %v619 = vsub.f32 %v240, %v618
        %620 = vmatmul.mubr.f32.gmra.mrb[0].mxu0 %v619
        %v621 = vpop.f32.mrb[0].mxu0
        %v622 = vadd.f32 %v500, %v621
        %v623 = vpop.f32.mrb[0].mxu0
        %624 = vmatprep.mubr.f32.mxu0 0.0
        %v625 = vand.u32 %v243, 4294901760
        %v626 = vsub.f32 %v243, %v625
        %627 = vmatmul.mubr.f32.gmra.mrb[0].mxu0 %v626
        %v628 = vpop.f32.mrb[0].mxu0
        %v629 = vadd.f32 %v506, %v628
        %v630 = vpop.f32.mrb[0].mxu0
        %631 = vmatprep.mubr.f32.mxu0 0.0
        %v632 = vand.u32 %v246, 4294901760
        %v633 = vsub.f32 %v246, %v632
        %634 = vmatmul.mubr.f32.gmra.mrb[0].mxu0 %v633
        %v635 = vpop.f32.mrb[0].mxu0
        %v636 = vadd.f32 %v512, %v635
        %v637 = vpop.f32.mrb[0].mxu0
        %638 = vmatprep.mubr.f32.mxu0 0.0
        %v639 = vand.u32 %v249, 4294901760
        %v640 = vsub.f32 %v249, %v639
        %641 = vmatmul.mubr.f32.gmra.mrb[0].mxu0 %v640
        %v642 = vpop.f32.mrb[0].mxu0
        %v643 = vadd.f32 %v518, %v642
        %v644 = vpop.f32.mrb[0].mxu0
        %645 = vmatprep.mubr.f32.mxu0 0.0
        %v646 = vand.u32 %v252, 4294901760
        %v647 = vsub.f32 %v252, %v646
        %648 = vmatmul.mubr.f32.gmra.mrb[0].mxu0 %v647
        %v649 = vpop.f32.mrb[0].mxu0
        %v650 = vadd.f32 %v524, %v649
        %v651 = vpop.f32.mrb[0].mxu0
        %652 = vmatprep.mubr.f32.mxu0 0.0
        %v653 = vand.u32 %v255, 4294901760
        %v654 = vsub.f32 %v255, %v653
        %655 = vmatmul.mubr.f32.gmra.mrb[0].mxu0 %v654
        %v656 = vpop.f32.mrb[0].mxu0
        %v657 = vadd.f32 %v530, %v656
        %v658 = vpop.f32.mrb[0].mxu0
        %659 = vdwg.mxu0
        %660 = vmatprep.subr.mxu0 0.0
        %v661 = vand.u32 %v229, 4294901760
        %662 = vmatpush1.msra.mxu0 %v661
        %663 = vmatprep.subr.mxu0 0.0
        %v664 = vand.u32 %v230, 4294901760
        %665 = vmatpush1.msra.mxu0 %v664
        %666 = vmatprep.subr.mxu0 0.0
        %v667 = vand.u32 %v231, 4294901760
        %668 = vmatpush1.msra.mxu0 %v667
        %669 = vmatprep.subr.mxu0 0.0
        %670 = vmatpush1.msra.mxu0 0.0
        %671 = vmatprep.subr.mxu0 0.0
        %672 = vmatpush1.msra.mxu0 0.0
        %673 = vmatprep.subr.mxu0 0.0
        %674 = vmatpush1.msra.mxu0 0.0
        %675 = vmatprep.subr.mxu0 0.0
        %676 = vmatpush1.msra.mxu0 0.0
        %677 = vmatprep.subr.mxu0 0.0
        %678 = vmatpush1.msra.mxu0 0.0
        %679 = vmatprep.subr.mxu0 0.0
        %680 = vmatpush1.msra.mxu0 0.0
        %681 = vmatprep.subr.mxu0 0.0
        %682 = vmatpush1.msra.mxu0 0.0
        %683 = vmatprep.subr.mxu0 0.0
        %684 = vmatpush1.msra.mxu0 0.0
        %685 = vmatprep.subr.mxu0 0.0
        %686 = vmatpush1.msra.mxu0 0.0
        %687 = vmatprep.subr.mxu0 0.0
        %688 = vmatpush1.msra.mxu0 0.0
        %689 = vmatprep.subr.mxu0 0.0
        %690 = vmatpush1.msra.mxu0 0.0
        %691 = vmatprep.subr.mxu0 0.0
        %692 = vmatpush1.msra.mxu0 0.0
        %693 = vmatprep.subr.mxu0 0.0
        %694 = vmatpush1.msra.mxu0 0.0
        %695 = vmatprep.subr.mxu0 0.0
        %696 = vmatpush1.msra.mxu0 0.0
        %697 = vmatprep.subr.mxu0 0.0
        %698 = vmatpush1.msra.mxu0 0.0
        %699 = vmatprep.subr.mxu0 0.0
        %700 = vmatpush1.msra.mxu0 0.0
        %701 = vmatprep.subr.mxu0 0.0
        %702 = vmatpush1.msra.mxu0 0.0
        %703 = vmatprep.subr.mxu0 0.0
        %704 = vmatpush1.msra.mxu0 0.0
        %705 = vmatprep.subr.mxu0 0.0
        %706 = vmatpush1.msra.mxu0 0.0
        %707 = vmatprep.subr.mxu0 0.0
        %708 = vmatpush1.msra.mxu0 0.0
        %709 = vmatprep.subr.mxu0 0.0
        %710 = vmatpush1.msra.mxu0 0.0
        %711 = vmatprep.subr.mxu0 0.0
        %712 = vmatpush1.msra.mxu0 0.0
        %713 = vmatprep.subr.mxu0 0.0
        %714 = vmatpush1.msra.mxu0 0.0
        %715 = vmatprep.subr.mxu0 0.0
        %716 = vmatpush1.msra.mxu0 0.0
        %717 = vmatprep.subr.mxu0 0.0
        %718 = vmatpush1.msra.mxu0 0.0
        %719 = vmatprep.subr.mxu0 0.0
        %720 = vmatpush1.msra.mxu0 0.0
        %721 = vmatprep.subr.mxu0 0.0
        %722 = vmatpush1.msra.mxu0 0.0
        %723 = vmatprep.subr.mxu0 0.0
        %724 = vmatpush1.msra.mxu0 0.0
        %725 = vmatprep.subr.mxu0 0.0
        %726 = vmatpush1.msra.mxu0 0.0
        %727 = vmatprep.mubr.f32.mxu0 0.0
        %v728 = vand.u32 %v234, 4294901760
        %v729 = vsub.f32 %v234, %v728
        %v730 = vand.u32 %v729, 4294901760
        %731 = vmatmul.mubr.f32.gmra.mrb[0].mxu0 %v730
        %v732 = vpop.f32.mrb[0].mxu0
        %v733 = vadd.f32 %v608, %v732
        %v734 = vpop.f32.mrb[0].mxu0
        %735 = vmatprep.mubr.f32.mxu0 0.0
        %v736 = vand.u32 %v237, 4294901760
        %v737 = vsub.f32 %v237, %v736
        %v738 = vand.u32 %v737, 4294901760
        %739 = vmatmul.mubr.f32.gmra.mrb[0].mxu0 %v738
        %v740 = vpop.f32.mrb[0].mxu0
        %v741 = vadd.f32 %v615, %v740
        %v742 = vpop.f32.mrb[0].mxu0
        %743 = vmatprep.mubr.f32.mxu0 0.0
        %v744 = vand.u32 %v240, 4294901760
        %v745 = vsub.f32 %v240, %v744
        %v746 = vand.u32 %v745, 4294901760
        %747 = vmatmul.mubr.f32.gmra.mrb[0].mxu0 %v746
        %v748 = vpop.f32.mrb[0].mxu0
        %v749 = vadd.f32 %v622, %v748
        %v750 = vpop.f32.mrb[0].mxu0
        %751 = vmatprep.mubr.f32.mxu0 0.0
        %v752 = vand.u32 %v243, 4294901760
        %v753 = vsub.f32 %v243, %v752
        %v754 = vand.u32 %v753, 4294901760
        %755 = vmatmul.mubr.f32.gmra.mrb[0].mxu0 %v754
        %v756 = vpop.f32.mrb[0].mxu0
        %v757 = vadd.f32 %v629, %v756
        %v758 = vpop.f32.mrb[0].mxu0
        %759 = vmatprep.mubr.f32.mxu0 0.0
        %v760 = vand.u32 %v246, 4294901760
        %v761 = vsub.f32 %v246, %v760
        %v762 = vand.u32 %v761, 4294901760
        %763 = vmatmul.mubr.f32.gmra.mrb[0].mxu0 %v762
        %v764 = vpop.f32.mrb[0].mxu0
        %v765 = vadd.f32 %v636, %v764
        %v766 = vpop.f32.mrb[0].mxu0
        %767 = vmatprep.mubr.f32.mxu0 0.0
        %v768 = vand.u32 %v249, 4294901760
        %v769 = vsub.f32 %v249, %v768
        %v770 = vand.u32 %v769, 4294901760
        %771 = vmatmul.mubr.f32.gmra.mrb[0].mxu0 %v770
        %v772 = vpop.f32.mrb[0].mxu0
        %v773 = vadd.f32 %v643, %v772
        %v774 = vpop.f32.mrb[0].mxu0
        %775 = vmatprep.mubr.f32.mxu0 0.0
        %v776 = vand.u32 %v252, 4294901760
        %v777 = vsub.f32 %v252, %v776
        %v778 = vand.u32 %v777, 4294901760
        %779 = vmatmul.mubr.f32.gmra.mrb[0].mxu0 %v778
        %v780 = vpop.f32.mrb[0].mxu0
        %v781 = vadd.f32 %v650, %v780
        %v782 = vpop.f32.mrb[0].mxu0
        %783 = vmatprep.mubr.f32.mxu0 0.0
        %v784 = vand.u32 %v255, 4294901760
        %v785 = vsub.f32 %v255, %v784
        %v786 = vand.u32 %v785, 4294901760
        %787 = vmatmul.mubr.f32.gmra.mrb[0].mxu0 %v786
        %v788 = vpop.f32.mrb[0].mxu0
        %v789 = vadd.f32 %v657, %v788
        %v790 = vpop.f32.mrb[0].mxu0
        %791 = vdwg.mxu0
        %792 = vmatprep.subr.mxu0 0.0
        %v793 = vand.u32 %v229, 4294901760
        %v794 = vsub.f32 %v229, %v793
        %v795 = vand.u32 %v794, 4294901760
        %796 = vmatpush1.msra.mxu0 %v795
        %797 = vmatprep.subr.mxu0 0.0
        %v798 = vand.u32 %v230, 4294901760
        %v799 = vsub.f32 %v230, %v798
        %v800 = vand.u32 %v799, 4294901760
        %801 = vmatpush1.msra.mxu0 %v800
        %802 = vmatprep.subr.mxu0 0.0
        %v803 = vand.u32 %v231, 4294901760
        %v804 = vsub.f32 %v231, %v803
        %v805 = vand.u32 %v804, 4294901760
        %806 = vmatpush1.msra.mxu0 %v805
        %807 = vmatprep.subr.mxu0 0.0
        %808 = vmatpush1.msra.mxu0 0.0
        %809 = vmatprep.subr.mxu0 0.0
        %810 = vmatpush1.msra.mxu0 0.0
        %811 = vmatprep.subr.mxu0 0.0
        %812 = vmatpush1.msra.mxu0 0.0
        %813 = vmatprep.subr.mxu0 0.0
        %814 = vmatpush1.msra.mxu0 0.0
        %815 = vmatprep.subr.mxu0 0.0
        %816 = vmatpush1.msra.mxu0 0.0
        %817 = vmatprep.subr.mxu0 0.0
        %818 = vmatpush1.msra.mxu0 0.0
        %819 = vmatprep.subr.mxu0 0.0
        %820 = vmatpush1.msra.mxu0 0.0
        %821 = vmatprep.subr.mxu0 0.0
        %822 = vmatpush1.msra.mxu0 0.0
        %823 = vmatprep.subr.mxu0 0.0
        %824 = vmatpush1.msra.mxu0 0.0
        %825 = vmatprep.subr.mxu0 0.0
        %826 = vmatpush1.msra.mxu0 0.0
        %827 = vmatprep.subr.mxu0 0.0
        %828 = vmatpush1.msra.mxu0 0.0
        %829 = vmatprep.subr.mxu0 0.0
        %830 = vmatpush1.msra.mxu0 0.0
        %831 = vmatprep.subr.mxu0 0.0
        %832 = vmatpush1.msra.mxu0 0.0
        %833 = vmatprep.subr.mxu0 0.0
        %834 = vmatpush1.msra.mxu0 0.0
        %835 = vmatprep.subr.mxu0 0.0
        %836 = vmatpush1.msra.mxu0 0.0
        %837 = vmatprep.subr.mxu0 0.0
        %838 = vmatpush1.msra.mxu0 0.0
        %839 = vmatprep.subr.mxu0 0.0
        %840 = vmatpush1.msra.mxu0 0.0
        %841 = vmatprep.subr.mxu0 0.0
        %842 = vmatpush1.msra.mxu0 0.0
        %843 = vmatprep.subr.mxu0 0.0
        %844 = vmatpush1.msra.mxu0 0.0
        %845 = vmatprep.subr.mxu0 0.0
        %846 = vmatpush1.msra.mxu0 0.0
        %847 = vmatprep.subr.mxu0 0.0
        %848 = vmatpush1.msra.mxu0 0.0
        %849 = vmatprep.subr.mxu0 0.0
        %850 = vmatpush1.msra.mxu0 0.0
        %851 = vmatprep.subr.mxu0 0.0
        %852 = vmatpush1.msra.mxu0 0.0
        %853 = vmatprep.subr.mxu0 0.0
        %854 = vmatpush1.msra.mxu0 0.0
        %855 = vmatprep.subr.mxu0 0.0
        %856 = vmatpush1.msra.mxu0 0.0
        %857 = vmatprep.subr.mxu0 0.0
        %858 = vmatpush1.msra.mxu0 0.0
        %859 = vmatprep.subr.mxu0 0.0
        %860 = vmatpush1.msra.mxu0 0.0
        %861 = vmatprep.subr.mxu0 0.0
        %862 = vmatpush1.msra.mxu0 0.0
        %863 = vmatprep.subr.mxu0 0.0
        %864 = vmatpush1.msra.mxu0 0.0
        %865 = vmatprep.mubr.f32.mxu0 0.0
        %v866 = vand.u32 %v234, 4294901760
        %867 = vmatmul.mubr.f32.gmra.mrb[0].mxu0 %v866
        %v868 = vpop.f32.mrb[0].mxu0
        %v869 = vadd.f32 %v733, %v868
        %v870 = vpop.f32.mrb[0].mxu0
        %871 = vmatprep.mubr.f32.mxu0 0.0
        %v872 = vand.u32 %v237, 4294901760
        %873 = vmatmul.mubr.f32.gmra.mrb[0].mxu0 %v872
        %v874 = vpop.f32.mrb[0].mxu0
        %v875 = vadd.f32 %v741, %v874
        %v876 = vpop.f32.mrb[0].mxu0
        %877 = vmatprep.mubr.f32.mxu0 0.0
        %v878 = vand.u32 %v240, 4294901760
        %879 = vmatmul.mubr.f32.gmra.mrb[0].mxu0 %v878
        %v880 = vpop.f32.mrb[0].mxu0
        %v881 = vadd.f32 %v749, %v880
        %v882 = vpop.f32.mrb[0].mxu0
        %883 = vmatprep.mubr.f32.mxu0 0.0
        %v884 = vand.u32 %v243, 4294901760
        %885 = vmatmul.mubr.f32.gmra.mrb[0].mxu0 %v884
        %v886 = vpop.f32.mrb[0].mxu0
        %v887 = vadd.f32 %v757, %v886
        %v888 = vpop.f32.mrb[0].mxu0
        %889 = vmatprep.mubr.f32.mxu0 0.0
        %v890 = vand.u32 %v246, 4294901760
        %891 = vmatmul.mubr.f32.gmra.mrb[0].mxu0 %v890
        %v892 = vpop.f32.mrb[0].mxu0
        %v893 = vadd.f32 %v765, %v892
        %v894 = vpop.f32.mrb[0].mxu0
        %895 = vmatprep.mubr.f32.mxu0 0.0
        %v896 = vand.u32 %v249, 4294901760
        %897 = vmatmul.mubr.f32.gmra.mrb[0].mxu0 %v896
        %v898 = vpop.f32.mrb[0].mxu0
        %v899 = vadd.f32 %v773, %v898
        %v900 = vpop.f32.mrb[0].mxu0
        %901 = vmatprep.mubr.f32.mxu0 0.0
        %v902 = vand.u32 %v252, 4294901760
        %903 = vmatmul.mubr.f32.gmra.mrb[0].mxu0 %v902
        %v904 = vpop.f32.mrb[0].mxu0
        %v905 = vadd.f32 %v781, %v904
        %v906 = vpop.f32.mrb[0].mxu0
        %907 = vmatprep.mubr.f32.mxu0 0.0
        %v908 = vand.u32 %v255, 4294901760
        %909 = vmatmul.mubr.f32.gmra.mrb[0].mxu0 %v908
        %v910 = vpop.f32.mrb[0].mxu0
        %v911 = vadd.f32 %v789, %v910
        %v912 = vpop.f32.mrb[0].mxu0
        %913 = vdwg.mxu0
        %914 = vmatprep.subr.mxu0 0.0
        %v915 = vand.u32 %v229, 4294901760
        %916 = vmatpush1.msra.mxu0 %v915
        %917 = vmatprep.subr.mxu0 0.0
        %v918 = vand.u32 %v230, 4294901760
        %919 = vmatpush1.msra.mxu0 %v918
        %920 = vmatprep.subr.mxu0 0.0
        %v921 = vand.u32 %v231, 4294901760
        %922 = vmatpush1.msra.mxu0 %v921
        %923 = vmatprep.subr.mxu0 0.0
        %924 = vmatpush1.msra.mxu0 0.0
        %925 = vmatprep.subr.mxu0 0.0
        %926 = vmatpush1.msra.mxu0 0.0
        %927 = vmatprep.subr.mxu0 0.0
        %928 = vmatpush1.msra.mxu0 0.0
        %929 = vmatprep.subr.mxu0 0.0
        %930 = vmatpush1.msra.mxu0 0.0
        %931 = vmatprep.subr.mxu0 0.0
        %932 = vmatpush1.msra.mxu0 0.0
        %933 = vmatprep.subr.mxu0 0.0
        %934 = vmatpush1.msra.mxu0 0.0
        %935 = vmatprep.subr.mxu0 0.0
        %936 = vmatpush1.msra.mxu0 0.0
        %937 = vmatprep.subr.mxu0 0.0
        %938 = vmatpush1.msra.mxu0 0.0
        %939 = vmatprep.subr.mxu0 0.0
        %940 = vmatpush1.msra.mxu0 0.0
        %941 = vmatprep.subr.mxu0 0.0
        %942 = vmatpush1.msra.mxu0 0.0
        %943 = vmatprep.subr.mxu0 0.0
        %944 = vmatpush1.msra.mxu0 0.0
        %945 = vmatprep.subr.mxu0 0.0
        %946 = vmatpush1.msra.mxu0 0.0
        %947 = vmatprep.subr.mxu0 0.0
        %948 = vmatpush1.msra.mxu0 0.0
        %949 = vmatprep.subr.mxu0 0.0
        %950 = vmatpush1.msra.mxu0 0.0
        %951 = vmatprep.subr.mxu0 0.0
        %952 = vmatpush1.msra.mxu0 0.0
        %953 = vmatprep.subr.mxu0 0.0
        %954 = vmatpush1.msra.mxu0 0.0
        %955 = vmatprep.subr.mxu0 0.0
        %956 = vmatpush1.msra.mxu0 0.0
        %957 = vmatprep.subr.mxu0 0.0
        %958 = vmatpush1.msra.mxu0 0.0
        %959 = vmatprep.subr.mxu0 0.0
        %960 = vmatpush1.msra.mxu0 0.0
        %961 = vmatprep.subr.mxu0 0.0
        %962 = vmatpush1.msra.mxu0 0.0
        %963 = vmatprep.subr.mxu0 0.0
        %964 = vmatpush1.msra.mxu0 0.0
        %965 = vmatprep.subr.mxu0 0.0
        %966 = vmatpush1.msra.mxu0 0.0
        %967 = vmatprep.subr.mxu0 0.0
        %968 = vmatpush1.msra.mxu0 0.0
        %969 = vmatprep.subr.mxu0 0.0
        %970 = vmatpush1.msra.mxu0 0.0
        %971 = vmatprep.subr.mxu0 0.0
        %972 = vmatpush1.msra.mxu0 0.0
        %973 = vmatprep.subr.mxu0 0.0
        %974 = vmatpush1.msra.mxu0 0.0
        %975 = vmatprep.subr.mxu0 0.0
        %976 = vmatpush1.msra.mxu0 0.0
        %977 = vmatprep.subr.mxu0 0.0
        %978 = vmatpush1.msra.mxu0 0.0
        %979 = vmatprep.subr.mxu0 0.0
        %980 = vmatpush1.msra.mxu0 0.0
        %981 = vmatprep.mubr.f32.mxu0 0.0
        %v982 = vand.u32 %v234, 4294901760
        %983 = vmatmul.mubr.f32.gmra.mrb[0].mxu0 %v982
        %v984 = vpop.f32.mrb[0].mxu0
        %v985 = vadd.f32 %v869, %v984
        %v986 = vpop.f32.mrb[0].mxu0
        %987 = vmatprep.mubr.f32.mxu0 0.0
        %v988 = vand.u32 %v237, 4294901760
        %989 = vmatmul.mubr.f32.gmra.mrb[0].mxu0 %v988
        %v990 = vpop.f32.mrb[0].mxu0
        %v991 = vadd.f32 %v875, %v990
        %v992 = vpop.f32.mrb[0].mxu0
        %993 = vmatprep.mubr.f32.mxu0 0.0
        %v994 = vand.u32 %v240, 4294901760
        %995 = vmatmul.mubr.f32.gmra.mrb[0].mxu0 %v994
        %v996 = vpop.f32.mrb[0].mxu0
        %v997 = vadd.f32 %v881, %v996
        %v998 = vpop.f32.mrb[0].mxu0
        %999 = vmatprep.mubr.f32.mxu0 0.0
        %v1000 = vand.u32 %v243, 4294901760
        %1001 = vmatmul.mubr.f32.gmra.mrb[0].mxu0 %v1000
        %v1002 = vpop.f32.mrb[0].mxu0
        %v1003 = vadd.f32 %v887, %v1002
        %v1004 = vpop.f32.mrb[0].mxu0
        %1005 = vmatprep.mubr.f32.mxu0 0.0
        %v1006 = vand.u32 %v246, 4294901760
        %1007 = vmatmul.mubr.f32.gmra.mrb[0].mxu0 %v1006
        %v1008 = vpop.f32.mrb[0].mxu0
        %v1009 = vadd.f32 %v893, %v1008
        %v1010 = vpop.f32.mrb[0].mxu0
        %1011 = vmatprep.mubr.f32.mxu0 0.0
        %v1012 = vand.u32 %v249, 4294901760
        %1013 = vmatmul.mubr.f32.gmra.mrb[0].mxu0 %v1012
        %v1014 = vpop.f32.mrb[0].mxu0
        %v1015 = vadd.f32 %v899, %v1014
        %v1016 = vpop.f32.mrb[0].mxu0
        %1017 = vmatprep.mubr.f32.mxu0 0.0
        %v1018 = vand.u32 %v252, 4294901760
        %1019 = vmatmul.mubr.f32.gmra.mrb[0].mxu0 %v1018
        %v1020 = vpop.f32.mrb[0].mxu0
        %v1021 = vadd.f32 %v905, %v1020
        %v1022 = vpop.f32.mrb[0].mxu0
        %1023 = vmatprep.mubr.f32.mxu0 0.0
        %v1024 = vand.u32 %v255, 4294901760
        %1025 = vmatmul.mubr.f32.gmra.mrb[0].mxu0 %v1024
        %v1026 = vpop.f32.mrb[0].mxu0
        %v1027 = vadd.f32 %v911, %v1026
        %v1028 = vpop.f32.mrb[0].mxu0
        %1029 = vdwg.mxu0
        %v1030 = vld [vmem:[#allocation7] sm:$0xff]
        %v1031 = vld [vmem:[#allocation7 + $0x8] sm:$0xff]
        %vm1032 = vcmask 130048
        %v1034 = vsel %vm1032, %v1030, 0
        %v1037 = vsel %vm1032, %v1031, 0
        %1039 = vmatprep.subr.mxu0 0.0
        %v1040 = vand.u32 %v985, 4294901760
        %1041 = vmatpush1.msra.mxu0 %v1040
        %1042 = vmatprep.subr.mxu0 0.0
        %v1043 = vand.u32 %v991, 4294901760
        %1044 = vmatpush1.msra.mxu0 %v1043
        %1045 = vmatprep.subr.mxu0 0.0
        %1046 = vmatpush1.msra.mxu0 0.0
        %1047 = vmatprep.subr.mxu0 0.0
        %1048 = vmatpush1.msra.mxu0 0.0
        %1049 = vmatprep.subr.mxu0 0.0
        %1050 = vmatpush1.msra.mxu0 0.0
        %1051 = vmatprep.subr.mxu0 0.0
        %1052 = vmatpush1.msra.mxu0 0.0
        %1053 = vmatprep.subr.mxu0 0.0
        %1054 = vmatpush1.msra.mxu0 0.0
        %1055 = vmatprep.subr.mxu0 0.0
        %1056 = vmatpush1.msra.mxu0 0.0
        %1057 = vmatprep.subr.mxu0 0.0
        %1058 = vmatpush1.msra.mxu0 0.0
        %1059 = vmatprep.subr.mxu0 0.0
        %1060 = vmatpush1.msra.mxu0 0.0
        %1061 = vmatprep.subr.mxu0 0.0
        %1062 = vmatpush1.msra.mxu0 0.0
        %1063 = vmatprep.subr.mxu0 0.0
        %1064 = vmatpush1.msra.mxu0 0.0
        %1065 = vmatprep.subr.mxu0 0.0
        %1066 = vmatpush1.msra.mxu0 0.0
        %1067 = vmatprep.subr.mxu0 0.0
        %1068 = vmatpush1.msra.mxu0 0.0
        %1069 = vmatprep.subr.mxu0 0.0
        %1070 = vmatpush1.msra.mxu0 0.0
        %1071 = vmatprep.subr.mxu0 0.0
        %1072 = vmatpush1.msra.mxu0 0.0
        %1073 = vmatprep.subr.mxu0 0.0
        %1074 = vmatpush1.msra.mxu0 0.0
        %1075 = vmatprep.subr.mxu0 0.0
        %1076 = vmatpush1.msra.mxu0 0.0
        %1077 = vmatprep.subr.mxu0 0.0
        %1078 = vmatpush1.msra.mxu0 0.0
        %1079 = vmatprep.subr.mxu0 0.0
        %1080 = vmatpush1.msra.mxu0 0.0
        %1081 = vmatprep.subr.mxu0 0.0
        %1082 = vmatpush1.msra.mxu0 0.0
        %1083 = vmatprep.subr.mxu0 0.0
        %1084 = vmatpush1.msra.mxu0 0.0
        %1085 = vmatprep.subr.mxu0 0.0
        %1086 = vmatpush1.msra.mxu0 0.0
        %1087 = vmatprep.subr.mxu0 0.0
        %1088 = vmatpush1.msra.mxu0 0.0
        %1089 = vmatprep.subr.mxu0 0.0
        %1090 = vmatpush1.msra.mxu0 0.0
        %1091 = vmatprep.subr.mxu0 0.0
        %1092 = vmatpush1.msra.mxu0 0.0
        %1093 = vmatprep.subr.mxu0 0.0
        %1094 = vmatpush1.msra.mxu0 0.0
        %1095 = vmatprep.subr.mxu0 0.0
        %1096 = vmatpush1.msra.mxu0 0.0
        %1097 = vmatprep.subr.mxu0 0.0
        %1098 = vmatpush1.msra.mxu0 0.0
        %1099 = vmatprep.subr.mxu0 0.0
        %1100 = vmatpush1.msra.mxu0 0.0
        %1101 = vmatprep.subr.mxu0 0.0
        %1102 = vmatpush1.msra.mxu0 0.0
        %1103 = vmatprep.subr.mxu0 0.0
        %1104 = vmatpush1.msra.mxu0 0.0
        %1105 = vmatprep.mubr.f32.mxu0 0.0
        %v1106 = vand.u32 %v1034, 4294901760
        %v1107 = vsub.f32 %v1034, %v1106
        %v1108 = vand.u32 %v1107, 4294901760
        %v1109 = vsub.f32 %v1107, %v1108
        %v1110 = vand.u32 %v1109, 4294901760
        %1111 = vmatmul.mubr.f32.gmra.mrb[0].mxu0 %v1110
        %v1112 = vpop.f32.mrb[0].mxu0
        %v1113 = vadd.f32 0.0, %v1112
        %v1114 = vpop.f32.mrb[0].mxu0
        %1115 = vmatprep.mubr.f32.mxu0 0.0
        %v1116 = vand.u32 %v1037, 4294901760
        %v1117 = vsub.f32 %v1037, %v1116
        %v1118 = vand.u32 %v1117, 4294901760
        %v1119 = vsub.f32 %v1117, %v1118
        %v1120 = vand.u32 %v1119, 4294901760
        %1121 = vmatmul.mubr.f32.gmra.mrb[0].mxu0 %v1120
        %v1122 = vpop.f32.mrb[0].mxu0
        %v1123 = vadd.f32 0.0, %v1122
        %v1124 = vpop.f32.mrb[0].mxu0
        %1125 = vdwg.mxu0
        %1126 = vmatprep.subr.mxu0 0.0
        %v1127 = vand.u32 %v985, 4294901760
        %v1128 = vsub.f32 %v985, %v1127
        %v1129 = vand.u32 %v1128, 4294901760
        %v1130 = vsub.f32 %v1128, %v1129
        %v1131 = vand.u32 %v1130, 4294901760
        %1132 = vmatpush1.msra.mxu0 %v1131
        %1133 = vmatprep.subr.mxu0 0.0
        %v1134 = vand.u32 %v991, 4294901760
        %v1135 = vsub.f32 %v991, %v1134
        %v1136 = vand.u32 %v1135, 4294901760
        %v1137 = vsub.f32 %v1135, %v1136
        %v1138 = vand.u32 %v1137, 4294901760
        %1139 = vmatpush1.msra.mxu0 %v1138
        %1140 = vmatprep.subr.mxu0 0.0
        %1141 = vmatpush1.msra.mxu0 0.0
        %1142 = vmatprep.subr.mxu0 0.0
        %1143 = vmatpush1.msra.mxu0 0.0
        %1144 = vmatprep.subr.mxu0 0.0
        %1145 = vmatpush1.msra.mxu0 0.0
        %1146 = vmatprep.subr.mxu0 0.0
        %1147 = vmatpush1.msra.mxu0 0.0
        %1148 = vmatprep.subr.mxu0 0.0
        %1149 = vmatpush1.msra.mxu0 0.0
        %1150 = vmatprep.subr.mxu0 0.0
        %1151 = vmatpush1.msra.mxu0 0.0
        %1152 = vmatprep.subr.mxu0 0.0
        %1153 = vmatpush1.msra.mxu0 0.0
        %1154 = vmatprep.subr.mxu0 0.0
        %1155 = vmatpush1.msra.mxu0 0.0
        %1156 = vmatprep.subr.mxu0 0.0
        %1157 = vmatpush1.msra.mxu0 0.0
        %1158 = vmatprep.subr.mxu0 0.0
        %1159 = vmatpush1.msra.mxu0 0.0
        %1160 = vmatprep.subr.mxu0 0.0
        %1161 = vmatpush1.msra.mxu0 0.0
        %1162 = vmatprep.subr.mxu0 0.0
        %1163 = vmatpush1.msra.mxu0 0.0
        %1164 = vmatprep.subr.mxu0 0.0
        %1165 = vmatpush1.msra.mxu0 0.0
        %1166 = vmatprep.subr.mxu0 0.0
        %1167 = vmatpush1.msra.mxu0 0.0
        %1168 = vmatprep.subr.mxu0 0.0
        %1169 = vmatpush1.msra.mxu0 0.0
        %1170 = vmatprep.subr.mxu0 0.0
        %1171 = vmatpush1.msra.mxu0 0.0
        %1172 = vmatprep.subr.mxu0 0.0
        %1173 = vmatpush1.msra.mxu0 0.0
        %1174 = vmatprep.subr.mxu0 0.0
        %1175 = vmatpush1.msra.mxu0 0.0
        %1176 = vmatprep.subr.mxu0 0.0
        %1177 = vmatpush1.msra.mxu0 0.0
        %1178 = vmatprep.subr.mxu0 0.0
        %1179 = vmatpush1.msra.mxu0 0.0
        %1180 = vmatprep.subr.mxu0 0.0
        %1181 = vmatpush1.msra.mxu0 0.0
        %1182 = vmatprep.subr.mxu0 0.0
        %1183 = vmatpush1.msra.mxu0 0.0
        %1184 = vmatprep.subr.mxu0 0.0
        %1185 = vmatpush1.msra.mxu0 0.0
        %1186 = vmatprep.subr.mxu0 0.0
        %1187 = vmatpush1.msra.mxu0 0.0
        %1188 = vmatprep.subr.mxu0 0.0
        %1189 = vmatpush1.msra.mxu0 0.0
        %1190 = vmatprep.subr.mxu0 0.0
        %1191 = vmatpush1.msra.mxu0 0.0
        %1192 = vmatprep.subr.mxu0 0.0
        %1193 = vmatpush1.msra.mxu0 0.0
        %1194 = vmatprep.subr.mxu0 0.0
        %1195 = vmatpush1.msra.mxu0 0.0
        %1196 = vmatprep.subr.mxu0 0.0
        %1197 = vmatpush1.msra.mxu0 0.0
        %1198 = vmatprep.subr.mxu0 0.0
        %1199 = vmatpush1.msra.mxu0 0.0
        %1200 = vmatprep.mubr.f32.mxu0 0.0
        %v1201 = vand.u32 %v1034, 4294901760
        %1202 = vmatmul.mubr.f32.gmra.mrb[0].mxu0 %v1201
        %v1203 = vpop.f32.mrb[0].mxu0
        %v1204 = vadd.f32 %v1113, %v1203
        %v1205 = vpop.f32.mrb[0].mxu0
        %1206 = vmatprep.mubr.f32.mxu0 0.0
        %v1207 = vand.u32 %v1037, 4294901760
        %1208 = vmatmul.mubr.f32.gmra.mrb[0].mxu0 %v1207
        %v1209 = vpop.f32.mrb[0].mxu0
        %v1210 = vadd.f32 %v1123, %v1209
        %v1211 = vpop.f32.mrb[0].mxu0
        %1212 = vdwg.mxu0
        %1213 = vmatprep.subr.mxu0 0.0
        %v1214 = vand.u32 %v985, 4294901760
        %v1215 = vsub.f32 %v985, %v1214
        %1216 = vmatpush1.msra.mxu0 %v1215
        %1217 = vmatprep.subr.mxu0 0.0
        %v1218 = vand.u32 %v991, 4294901760
        %v1219 = vsub.f32 %v991, %v1218
        %1220 = vmatpush1.msra.mxu0 %v1219
        %1221 = vmatprep.subr.mxu0 0.0
        %1222 = vmatpush1.msra.mxu0 0.0
        %1223 = vmatprep.subr.mxu0 0.0
        %1224 = vmatpush1.msra.mxu0 0.0
        %1225 = vmatprep.subr.mxu0 0.0
        %1226 = vmatpush1.msra.mxu0 0.0
        %1227 = vmatprep.subr.mxu0 0.0
        %1228 = vmatpush1.msra.mxu0 0.0
        %1229 = vmatprep.subr.mxu0 0.0
        %1230 = vmatpush1.msra.mxu0 0.0
        %1231 = vmatprep.subr.mxu0 0.0
        %1232 = vmatpush1.msra.mxu0 0.0
        %1233 = vmatprep.subr.mxu0 0.0
        %1234 = vmatpush1.msra.mxu0 0.0
        %1235 = vmatprep.subr.mxu0 0.0
        %1236 = vmatpush1.msra.mxu0 0.0
        %1237 = vmatprep.subr.mxu0 0.0
        %1238 = vmatpush1.msra.mxu0 0.0
        %1239 = vmatprep.subr.mxu0 0.0
        %1240 = vmatpush1.msra.mxu0 0.0
        %1241 = vmatprep.subr.mxu0 0.0
        %1242 = vmatpush1.msra.mxu0 0.0
        %1243 = vmatprep.subr.mxu0 0.0
        %1244 = vmatpush1.msra.mxu0 0.0
        %1245 = vmatprep.subr.mxu0 0.0
        %1246 = vmatpush1.msra.mxu0 0.0
        %1247 = vmatprep.subr.mxu0 0.0
        %1248 = vmatpush1.msra.mxu0 0.0
        %1249 = vmatprep.subr.mxu0 0.0
        %1250 = vmatpush1.msra.mxu0 0.0
        %1251 = vmatprep.subr.mxu0 0.0
        %1252 = vmatpush1.msra.mxu0 0.0
        %1253 = vmatprep.subr.mxu0 0.0
        %1254 = vmatpush1.msra.mxu0 0.0
        %1255 = vmatprep.subr.mxu0 0.0
        %1256 = vmatpush1.msra.mxu0 0.0
        %1257 = vmatprep.subr.mxu0 0.0
        %1258 = vmatpush1.msra.mxu0 0.0
        %1259 = vmatprep.subr.mxu0 0.0
        %1260 = vmatpush1.msra.mxu0 0.0
        %1261 = vmatprep.subr.mxu0 0.0
        %1262 = vmatpush1.msra.mxu0 0.0
        %1263 = vmatprep.subr.mxu0 0.0
        %1264 = vmatpush1.msra.mxu0 0.0
        %1265 = vmatprep.subr.mxu0 0.0
        %1266 = vmatpush1.msra.mxu0 0.0
        %1267 = vmatprep.subr.mxu0 0.0
        %1268 = vmatpush1.msra.mxu0 0.0
        %1269 = vmatprep.subr.mxu0 0.0
        %1270 = vmatpush1.msra.mxu0 0.0
        %1271 = vmatprep.subr.mxu0 0.0
        %1272 = vmatpush1.msra.mxu0 0.0
        %1273 = vmatprep.subr.mxu0 0.0
        %1274 = vmatpush1.msra.mxu0 0.0
        %1275 = vmatprep.subr.mxu0 0.0
        %1276 = vmatpush1.msra.mxu0 0.0
        %1277 = vmatprep.subr.mxu0 0.0
        %1278 = vmatpush1.msra.mxu0 0.0
        %1279 = vmatprep.subr.mxu0 0.0
        %1280 = vmatpush1.msra.mxu0 0.0
        %1281 = vmatprep.mubr.f32.mxu0 0.0
        %v1282 = vand.u32 %v1034, 4294901760
        %v1283 = vsub.f32 %v1034, %v1282
        %1284 = vmatmul.mubr.f32.gmra.mrb[0].mxu0 %v1283
        %v1285 = vpop.f32.mrb[0].mxu0
        %v1286 = vadd.f32 %v1204, %v1285
        %v1287 = vpop.f32.mrb[0].mxu0
        %1288 = vmatprep.mubr.f32.mxu0 0.0
        %v1289 = vand.u32 %v1037, 4294901760
        %v1290 = vsub.f32 %v1037, %v1289
        %1291 = vmatmul.mubr.f32.gmra.mrb[0].mxu0 %v1290
        %v1292 = vpop.f32.mrb[0].mxu0
        %v1293 = vadd.f32 %v1210, %v1292
        %v1294 = vpop.f32.mrb[0].mxu0
        %1295 = vdwg.mxu0
        %1296 = vmatprep.subr.mxu0 0.0
        %v1297 = vand.u32 %v985, 4294901760
        %1298 = vmatpush1.msra.mxu0 %v1297
        %1299 = vmatprep.subr.mxu0 0.0
        %v1300 = vand.u32 %v991, 4294901760
        %1301 = vmatpush1.msra.mxu0 %v1300
        %1302 = vmatprep.subr.mxu0 0.0
        %1303 = vmatpush1.msra.mxu0 0.0
        %1304 = vmatprep.subr.mxu0 0.0
        %1305 = vmatpush1.msra.mxu0 0.0
        %1306 = vmatprep.subr.mxu0 0.0
        %1307 = vmatpush1.msra.mxu0 0.0
        %1308 = vmatprep.subr.mxu0 0.0
        %1309 = vmatpush1.msra.mxu0 0.0
        %1310 = vmatprep.subr.mxu0 0.0
        %1311 = vmatpush1.msra.mxu0 0.0
        %1312 = vmatprep.subr.mxu0 0.0
        %1313 = vmatpush1.msra.mxu0 0.0
        %1314 = vmatprep.subr.mxu0 0.0
        %1315 = vmatpush1.msra.mxu0 0.0
        %1316 = vmatprep.subr.mxu0 0.0
        %1317 = vmatpush1.msra.mxu0 0.0
        %1318 = vmatprep.subr.mxu0 0.0
        %1319 = vmatpush1.msra.mxu0 0.0
        %1320 = vmatprep.subr.mxu0 0.0
        %1321 = vmatpush1.msra.mxu0 0.0
        %1322 = vmatprep.subr.mxu0 0.0
        %1323 = vmatpush1.msra.mxu0 0.0
        %1324 = vmatprep.subr.mxu0 0.0
        %1325 = vmatpush1.msra.mxu0 0.0
        %1326 = vmatprep.subr.mxu0 0.0
        %1327 = vmatpush1.msra.mxu0 0.0
        %1328 = vmatprep.subr.mxu0 0.0
        %1329 = vmatpush1.msra.mxu0 0.0
        %1330 = vmatprep.subr.mxu0 0.0
        %1331 = vmatpush1.msra.mxu0 0.0
        %1332 = vmatprep.subr.mxu0 0.0
        %1333 = vmatpush1.msra.mxu0 0.0
        %1334 = vmatprep.subr.mxu0 0.0
        %1335 = vmatpush1.msra.mxu0 0.0
        %1336 = vmatprep.subr.mxu0 0.0
        %1337 = vmatpush1.msra.mxu0 0.0
        %1338 = vmatprep.subr.mxu0 0.0
        %1339 = vmatpush1.msra.mxu0 0.0
        %1340 = vmatprep.subr.mxu0 0.0
        %1341 = vmatpush1.msra.mxu0 0.0
        %1342 = vmatprep.subr.mxu0 0.0
        %1343 = vmatpush1.msra.mxu0 0.0
        %1344 = vmatprep.subr.mxu0 0.0
        %1345 = vmatpush1.msra.mxu0 0.0
        %1346 = vmatprep.subr.mxu0 0.0
        %1347 = vmatpush1.msra.mxu0 0.0
        %1348 = vmatprep.subr.mxu0 0.0
        %1349 = vmatpush1.msra.mxu0 0.0
        %1350 = vmatprep.subr.mxu0 0.0
        %1351 = vmatpush1.msra.mxu0 0.0
        %1352 = vmatprep.subr.mxu0 0.0
        %1353 = vmatpush1.msra.mxu0 0.0
        %1354 = vmatprep.subr.mxu0 0.0
        %1355 = vmatpush1.msra.mxu0 0.0
        %1356 = vmatprep.subr.mxu0 0.0
        %1357 = vmatpush1.msra.mxu0 0.0
        %1358 = vmatprep.subr.mxu0 0.0
        %1359 = vmatpush1.msra.mxu0 0.0
        %1360 = vmatprep.subr.mxu0 0.0
        %1361 = vmatpush1.msra.mxu0 0.0
        %1362 = vmatprep.mubr.f32.mxu0 0.0
        %v1363 = vand.u32 %v1034, 4294901760
        %v1364 = vsub.f32 %v1034, %v1363
        %v1365 = vand.u32 %v1364, 4294901760
        %1366 = vmatmul.mubr.f32.gmra.mrb[0].mxu0 %v1365
        %v1367 = vpop.f32.mrb[0].mxu0
        %v1368 = vadd.f32 %v1286, %v1367
        %v1369 = vpop.f32.mrb[0].mxu0
        %1370 = vmatprep.mubr.f32.mxu0 0.0
        %v1371 = vand.u32 %v1037, 4294901760
        %v1372 = vsub.f32 %v1037, %v1371
        %v1373 = vand.u32 %v1372, 4294901760
        %1374 = vmatmul.mubr.f32.gmra.mrb[0].mxu0 %v1373
        %v1375 = vpop.f32.mrb[0].mxu0
        %v1376 = vadd.f32 %v1293, %v1375
        %v1377 = vpop.f32.mrb[0].mxu0
        %1378 = vdwg.mxu0
        %1379 = vmatprep.subr.mxu0 0.0
        %v1380 = vand.u32 %v985, 4294901760
        %v1381 = vsub.f32 %v985, %v1380
        %v1382 = vand.u32 %v1381, 4294901760
        %1383 = vmatpush1.msra.mxu0 %v1382
        %1384 = vmatprep.subr.mxu0 0.0
        %v1385 = vand.u32 %v991, 4294901760
        %v1386 = vsub.f32 %v991, %v1385
        %v1387 = vand.u32 %v1386, 4294901760
        %1388 = vmatpush1.msra.mxu0 %v1387
        %1389 = vmatprep.subr.mxu0 0.0
        %1390 = vmatpush1.msra.mxu0 0.0
        %1391 = vmatprep.subr.mxu0 0.0
        %1392 = vmatpush1.msra.mxu0 0.0
        %1393 = vmatprep.subr.mxu0 0.0
        %1394 = vmatpush1.msra.mxu0 0.0
        %1395 = vmatprep.subr.mxu0 0.0
        %1396 = vmatpush1.msra.mxu0 0.0
        %1397 = vmatprep.subr.mxu0 0.0
        %1398 = vmatpush1.msra.mxu0 0.0
        %1399 = vmatprep.subr.mxu0 0.0
        %1400 = vmatpush1.msra.mxu0 0.0
        %1401 = vmatprep.subr.mxu0 0.0
        %1402 = vmatpush1.msra.mxu0 0.0
        %1403 = vmatprep.subr.mxu0 0.0
        %1404 = vmatpush1.msra.mxu0 0.0
        %1405 = vmatprep.subr.mxu0 0.0
        %1406 = vmatpush1.msra.mxu0 0.0
        %1407 = vmatprep.subr.mxu0 0.0
        %1408 = vmatpush1.msra.mxu0 0.0
        %1409 = vmatprep.subr.mxu0 0.0
        %1410 = vmatpush1.msra.mxu0 0.0
        %1411 = vmatprep.subr.mxu0 0.0
        %1412 = vmatpush1.msra.mxu0 0.0
        %1413 = vmatprep.subr.mxu0 0.0
        %1414 = vmatpush1.msra.mxu0 0.0
        %1415 = vmatprep.subr.mxu0 0.0
        %1416 = vmatpush1.msra.mxu0 0.0
        %1417 = vmatprep.subr.mxu0 0.0
        %1418 = vmatpush1.msra.mxu0 0.0
        %1419 = vmatprep.subr.mxu0 0.0
        %1420 = vmatpush1.msra.mxu0 0.0
        %1421 = vmatprep.subr.mxu0 0.0
        %1422 = vmatpush1.msra.mxu0 0.0
        %1423 = vmatprep.subr.mxu0 0.0
        %1424 = vmatpush1.msra.mxu0 0.0
        %1425 = vmatprep.subr.mxu0 0.0
        %1426 = vmatpush1.msra.mxu0 0.0
        %1427 = vmatprep.subr.mxu0 0.0
        %1428 = vmatpush1.msra.mxu0 0.0
        %1429 = vmatprep.subr.mxu0 0.0
        %1430 = vmatpush1.msra.mxu0 0.0
        %1431 = vmatprep.subr.mxu0 0.0
        %1432 = vmatpush1.msra.mxu0 0.0
        %1433 = vmatprep.subr.mxu0 0.0
        %1434 = vmatpush1.msra.mxu0 0.0
        %1435 = vmatprep.subr.mxu0 0.0
        %1436 = vmatpush1.msra.mxu0 0.0
        %1437 = vmatprep.subr.mxu0 0.0
        %1438 = vmatpush1.msra.mxu0 0.0
        %1439 = vmatprep.subr.mxu0 0.0
        %1440 = vmatpush1.msra.mxu0 0.0
        %1441 = vmatprep.subr.mxu0 0.0
        %1442 = vmatpush1.msra.mxu0 0.0
        %1443 = vmatprep.subr.mxu0 0.0
        %1444 = vmatpush1.msra.mxu0 0.0
        %1445 = vmatprep.subr.mxu0 0.0
        %1446 = vmatpush1.msra.mxu0 0.0
        %1447 = vmatprep.subr.mxu0 0.0
        %1448 = vmatpush1.msra.mxu0 0.0
        %1449 = vmatprep.mubr.f32.mxu0 0.0
        %v1450 = vand.u32 %v1034, 4294901760
        %1451 = vmatmul.mubr.f32.gmra.mrb[0].mxu0 %v1450
        %v1452 = vpop.f32.mrb[0].mxu0
        %v1453 = vadd.f32 %v1368, %v1452
        %v1454 = vpop.f32.mrb[0].mxu0
        %1455 = vmatprep.mubr.f32.mxu0 0.0
        %v1456 = vand.u32 %v1037, 4294901760
        %1457 = vmatmul.mubr.f32.gmra.mrb[0].mxu0 %v1456
        %v1458 = vpop.f32.mrb[0].mxu0
        %v1459 = vadd.f32 %v1376, %v1458
        %v1460 = vpop.f32.mrb[0].mxu0
        %1461 = vdwg.mxu0
        %1462 = vmatprep.subr.mxu0 0.0
        %v1463 = vand.u32 %v985, 4294901760
        %1464 = vmatpush1.msra.mxu0 %v1463
        %1465 = vmatprep.subr.mxu0 0.0
        %v1466 = vand.u32 %v991, 4294901760
        %1467 = vmatpush1.msra.mxu0 %v1466
        %1468 = vmatprep.subr.mxu0 0.0
        %1469 = vmatpush1.msra.mxu0 0.0
        %1470 = vmatprep.subr.mxu0 0.0
        %1471 = vmatpush1.msra.mxu0 0.0
        %1472 = vmatprep.subr.mxu0 0.0
        %1473 = vmatpush1.msra.mxu0 0.0
        %1474 = vmatprep.subr.mxu0 0.0
        %1475 = vmatpush1.msra.mxu0 0.0
        %1476 = vmatprep.subr.mxu0 0.0
        %1477 = vmatpush1.msra.mxu0 0.0
        %1478 = vmatprep.subr.mxu0 0.0
        %1479 = vmatpush1.msra.mxu0 0.0
        %1480 = vmatprep.subr.mxu0 0.0
        %1481 = vmatpush1.msra.mxu0 0.0
        %1482 = vmatprep.subr.mxu0 0.0
        %1483 = vmatpush1.msra.mxu0 0.0
        %1484 = vmatprep.subr.mxu0 0.0
        %1485 = vmatpush1.msra.mxu0 0.0
        %1486 = vmatprep.subr.mxu0 0.0
        %1487 = vmatpush1.msra.mxu0 0.0
        %1488 = vmatprep.subr.mxu0 0.0
        %1489 = vmatpush1.msra.mxu0 0.0
        %1490 = vmatprep.subr.mxu0 0.0
        %1491 = vmatpush1.msra.mxu0 0.0
        %1492 = vmatprep.subr.mxu0 0.0
        %1493 = vmatpush1.msra.mxu0 0.0
        %1494 = vmatprep.subr.mxu0 0.0
        %1495 = vmatpush1.msra.mxu0 0.0
        %1496 = vmatprep.subr.mxu0 0.0
        %1497 = vmatpush1.msra.mxu0 0.0
        %1498 = vmatprep.subr.mxu0 0.0
        %1499 = vmatpush1.msra.mxu0 0.0
        %1500 = vmatprep.subr.mxu0 0.0
        %1501 = vmatpush1.msra.mxu0 0.0
        %1502 = vmatprep.subr.mxu0 0.0
        %1503 = vmatpush1.msra.mxu0 0.0
        %1504 = vmatprep.subr.mxu0 0.0
        %1505 = vmatpush1.msra.mxu0 0.0
        %1506 = vmatprep.subr.mxu0 0.0
        %1507 = vmatpush1.msra.mxu0 0.0
        %1508 = vmatprep.subr.mxu0 0.0
        %1509 = vmatpush1.msra.mxu0 0.0
        %1510 = vmatprep.subr.mxu0 0.0
        %1511 = vmatpush1.msra.mxu0 0.0
        %1512 = vmatprep.subr.mxu0 0.0
        %1513 = vmatpush1.msra.mxu0 0.0
        %1514 = vmatprep.subr.mxu0 0.0
        %1515 = vmatpush1.msra.mxu0 0.0
        %1516 = vmatprep.subr.mxu0 0.0
        %1517 = vmatpush1.msra.mxu0 0.0
        %1518 = vmatprep.subr.mxu0 0.0
        %1519 = vmatpush1.msra.mxu0 0.0
        %1520 = vmatprep.subr.mxu0 0.0
        %1521 = vmatpush1.msra.mxu0 0.0
        %1522 = vmatprep.subr.mxu0 0.0
        %1523 = vmatpush1.msra.mxu0 0.0
        %1524 = vmatprep.subr.mxu0 0.0
        %1525 = vmatpush1.msra.mxu0 0.0
        %1526 = vmatprep.subr.mxu0 0.0
        %1527 = vmatpush1.msra.mxu0 0.0
        %1528 = vmatprep.mubr.f32.mxu0 0.0
        %v1529 = vand.u32 %v1034, 4294901760
        %1530 = vmatmul.mubr.f32.gmra.mrb[0].mxu0 %v1529
        %v1531 = vpop.f32.mrb[0].mxu0
        %v1532 = vadd.f32 %v1453, %v1531
        %v1533 = vpop.f32.mrb[0].mxu0
        %1534 = vmatprep.mubr.f32.mxu0 0.0
        %v1535 = vand.u32 %v1037, 4294901760
        %1536 = vmatmul.mubr.f32.gmra.mrb[0].mxu0 %v1535
        %v1537 = vpop.f32.mrb[0].mxu0
        %v1538 = vadd.f32 %v1459, %v1537
        %v1539 = vpop.f32.mrb[0].mxu0
        %1540 = vdwg.mxu0
        %1541 = vmatprep.subr.mxu0 0.0
        %v1542 = vand.u32 %v997, 4294901760
        %1543 = vmatpush1.msra.mxu0 %v1542
        %1544 = vmatprep.subr.mxu0 0.0
        %v1545 = vand.u32 %v1003, 4294901760
        %1546 = vmatpush1.msra.mxu0 %v1545
        %1547 = vmatprep.subr.mxu0 0.0
        %1548 = vmatpush1.msra.mxu0 0.0
        %1549 = vmatprep.subr.mxu0 0.0
        %1550 = vmatpush1.msra.mxu0 0.0
        %1551 = vmatprep.subr.mxu0 0.0
        %1552 = vmatpush1.msra.mxu0 0.0
        %1553 = vmatprep.subr.mxu0 0.0
        %1554 = vmatpush1.msra.mxu0 0.0
        %1555 = vmatprep.subr.mxu0 0.0
        %1556 = vmatpush1.msra.mxu0 0.0
        %1557 = vmatprep.subr.mxu0 0.0
        %1558 = vmatpush1.msra.mxu0 0.0
        %1559 = vmatprep.subr.mxu0 0.0
        %1560 = vmatpush1.msra.mxu0 0.0
        %1561 = vmatprep.subr.mxu0 0.0
        %1562 = vmatpush1.msra.mxu0 0.0
        %1563 = vmatprep.subr.mxu0 0.0
        %1564 = vmatpush1.msra.mxu0 0.0
        %1565 = vmatprep.subr.mxu0 0.0
        %1566 = vmatpush1.msra.mxu0 0.0
        %1567 = vmatprep.subr.mxu0 0.0
        %1568 = vmatpush1.msra.mxu0 0.0
        %1569 = vmatprep.subr.mxu0 0.0
        %1570 = vmatpush1.msra.mxu0 0.0
        %1571 = vmatprep.subr.mxu0 0.0
        %1572 = vmatpush1.msra.mxu0 0.0
        %1573 = vmatprep.subr.mxu0 0.0
        %1574 = vmatpush1.msra.mxu0 0.0
        %1575 = vmatprep.subr.mxu0 0.0
        %1576 = vmatpush1.msra.mxu0 0.0
        %1577 = vmatprep.subr.mxu0 0.0
        %1578 = vmatpush1.msra.mxu0 0.0
        %1579 = vmatprep.subr.mxu0 0.0
        %1580 = vmatpush1.msra.mxu0 0.0
        %1581 = vmatprep.subr.mxu0 0.0
        %1582 = vmatpush1.msra.mxu0 0.0
        %1583 = vmatprep.subr.mxu0 0.0
        %1584 = vmatpush1.msra.mxu0 0.0
        %1585 = vmatprep.subr.mxu0 0.0
        %1586 = vmatpush1.msra.mxu0 0.0
        %1587 = vmatprep.subr.mxu0 0.0
        %1588 = vmatpush1.msra.mxu0 0.0
        %1589 = vmatprep.subr.mxu0 0.0
        %1590 = vmatpush1.msra.mxu0 0.0
        %1591 = vmatprep.subr.mxu0 0.0
        %1592 = vmatpush1.msra.mxu0 0.0
        %1593 = vmatprep.subr.mxu0 0.0
        %1594 = vmatpush1.msra.mxu0 0.0
        %1595 = vmatprep.subr.mxu0 0.0
        %1596 = vmatpush1.msra.mxu0 0.0
        %1597 = vmatprep.subr.mxu0 0.0
        %1598 = vmatpush1.msra.mxu0 0.0
        %1599 = vmatprep.subr.mxu0 0.0
        %1600 = vmatpush1.msra.mxu0 0.0
        %1601 = vmatprep.subr.mxu0 0.0
        %1602 = vmatpush1.msra.mxu0 0.0
        %1603 = vmatprep.subr.mxu0 0.0
        %1604 = vmatpush1.msra.mxu0 0.0
        %1605 = vmatprep.subr.mxu0 0.0
        %1606 = vmatpush1.msra.mxu0 0.0
        %1607 = vmatprep.mubr.f32.mxu0 0.0
        %v1608 = vand.u32 %v1034, 4294901760
        %v1609 = vsub.f32 %v1034, %v1608
        %v1610 = vand.u32 %v1609, 4294901760
        %v1611 = vsub.f32 %v1609, %v1610
        %v1612 = vand.u32 %v1611, 4294901760
        %1613 = vmatmul.mubr.f32.gmra.mrb[0].mxu0 %v1612
        %v1614 = vpop.f32.mrb[0].mxu0
        %v1615 = vadd.f32 0.0, %v1614
        %v1616 = vpop.f32.mrb[0].mxu0
        %1617 = vmatprep.mubr.f32.mxu0 0.0
        %v1618 = vand.u32 %v1037, 4294901760
        %v1619 = vsub.f32 %v1037, %v1618
        %v1620 = vand.u32 %v1619, 4294901760
        %v1621 = vsub.f32 %v1619, %v1620
        %v1622 = vand.u32 %v1621, 4294901760
        %1623 = vmatmul.mubr.f32.gmra.mrb[0].mxu0 %v1622
        %v1624 = vpop.f32.mrb[0].mxu0
        %v1625 = vadd.f32 0.0, %v1624
        %v1626 = vpop.f32.mrb[0].mxu0
        %1627 = vdwg.mxu0
        %1628 = vmatprep.subr.mxu0 0.0
        %v1629 = vand.u32 %v997, 4294901760
        %v1630 = vsub.f32 %v997, %v1629
        %v1631 = vand.u32 %v1630, 4294901760
        %v1632 = vsub.f32 %v1630, %v1631
        %v1633 = vand.u32 %v1632, 4294901760
        %1634 = vmatpush1.msra.mxu0 %v1633
        %1635 = vmatprep.subr.mxu0 0.0
        %v1636 = vand.u32 %v1003, 4294901760
        %v1637 = vsub.f32 %v1003, %v1636
        %v1638 = vand.u32 %v1637, 4294901760
        %v1639 = vsub.f32 %v1637, %v1638
        %v1640 = vand.u32 %v1639, 4294901760
        %1641 = vmatpush1.msra.mxu0 %v1640
        %1642 = vmatprep.subr.mxu0 0.0
        %1643 = vmatpush1.msra.mxu0 0.0
        %1644 = vmatprep.subr.mxu0 0.0
        %1645 = vmatpush1.msra.mxu0 0.0
        %1646 = vmatprep.subr.mxu0 0.0
        %1647 = vmatpush1.msra.mxu0 0.0
        %1648 = vmatprep.subr.mxu0 0.0
        %1649 = vmatpush1.msra.mxu0 0.0
        %1650 = vmatprep.subr.mxu0 0.0
        %1651 = vmatpush1.msra.mxu0 0.0
        %1652 = vmatprep.subr.mxu0 0.0
        %1653 = vmatpush1.msra.mxu0 0.0
        %1654 = vmatprep.subr.mxu0 0.0
        %1655 = vmatpush1.msra.mxu0 0.0
        %1656 = vmatprep.subr.mxu0 0.0
        %1657 = vmatpush1.msra.mxu0 0.0
        %1658 = vmatprep.subr.mxu0 0.0
        %1659 = vmatpush1.msra.mxu0 0.0
        %1660 = vmatprep.subr.mxu0 0.0
        %1661 = vmatpush1.msra.mxu0 0.0
        %1662 = vmatprep.subr.mxu0 0.0
        %1663 = vmatpush1.msra.mxu0 0.0
        %1664 = vmatprep.subr.mxu0 0.0
        %1665 = vmatpush1.msra.mxu0 0.0
        %1666 = vmatprep.subr.mxu0 0.0
        %1667 = vmatpush1.msra.mxu0 0.0
        %1668 = vmatprep.subr.mxu0 0.0
        %1669 = vmatpush1.msra.mxu0 0.0
        %1670 = vmatprep.subr.mxu0 0.0
        %1671 = vmatpush1.msra.mxu0 0.0
        %1672 = vmatprep.subr.mxu0 0.0
        %1673 = vmatpush1.msra.mxu0 0.0
        %1674 = vmatprep.subr.mxu0 0.0
        %1675 = vmatpush1.msra.mxu0 0.0
        %1676 = vmatprep.subr.mxu0 0.0
        %1677 = vmatpush1.msra.mxu0 0.0
        %1678 = vmatprep.subr.mxu0 0.0
        %1679 = vmatpush1.msra.mxu0 0.0
        %1680 = vmatprep.subr.mxu0 0.0
        %1681 = vmatpush1.msra.mxu0 0.0
        %1682 = vmatprep.subr.mxu0 0.0
        %1683 = vmatpush1.msra.mxu0 0.0
        %1684 = vmatprep.subr.mxu0 0.0
        %1685 = vmatpush1.msra.mxu0 0.0
        %1686 = vmatprep.subr.mxu0 0.0
        %1687 = vmatpush1.msra.mxu0 0.0
        %1688 = vmatprep.subr.mxu0 0.0
        %1689 = vmatpush1.msra.mxu0 0.0
        %1690 = vmatprep.subr.mxu0 0.0
        %1691 = vmatpush1.msra.mxu0 0.0
        %1692 = vmatprep.subr.mxu0 0.0
        %1693 = vmatpush1.msra.mxu0 0.0
        %1694 = vmatprep.subr.mxu0 0.0
        %1695 = vmatpush1.msra.mxu0 0.0
        %1696 = vmatprep.subr.mxu0 0.0
        %1697 = vmatpush1.msra.mxu0 0.0
        %1698 = vmatprep.subr.mxu0 0.0
        %1699 = vmatpush1.msra.mxu0 0.0
        %1700 = vmatprep.subr.mxu0 0.0
        %1701 = vmatpush1.msra.mxu0 0.0
        %1702 = vmatprep.mubr.f32.mxu0 0.0
        %v1703 = vand.u32 %v1034, 4294901760
        %1704 = vmatmul.mubr.f32.gmra.mrb[0].mxu0 %v1703
        %v1705 = vpop.f32.mrb[0].mxu0
        %v1706 = vadd.f32 %v1615, %v1705
        %v1707 = vpop.f32.mrb[0].mxu0
        %1708 = vmatprep.mubr.f32.mxu0 0.0
        %v1709 = vand.u32 %v1037, 4294901760
        %1710 = vmatmul.mubr.f32.gmra.mrb[0].mxu0 %v1709
        %v1711 = vpop.f32.mrb[0].mxu0
        %v1712 = vadd.f32 %v1625, %v1711
        %v1713 = vpop.f32.mrb[0].mxu0
        %1714 = vdwg.mxu0
        %1715 = vmatprep.subr.mxu0 0.0
        %v1716 = vand.u32 %v997, 4294901760
        %v1717 = vsub.f32 %v997, %v1716
        %1718 = vmatpush1.msra.mxu0 %v1717
        %1719 = vmatprep.subr.mxu0 0.0
        %v1720 = vand.u32 %v1003, 4294901760
        %v1721 = vsub.f32 %v1003, %v1720
        %1722 = vmatpush1.msra.mxu0 %v1721
        %1723 = vmatprep.subr.mxu0 0.0
        %1724 = vmatpush1.msra.mxu0 0.0
        %1725 = vmatprep.subr.mxu0 0.0
        %1726 = vmatpush1.msra.mxu0 0.0
        %1727 = vmatprep.subr.mxu0 0.0
        %1728 = vmatpush1.msra.mxu0 0.0
        %1729 = vmatprep.subr.mxu0 0.0
        %1730 = vmatpush1.msra.mxu0 0.0
        %1731 = vmatprep.subr.mxu0 0.0
        %1732 = vmatpush1.msra.mxu0 0.0
        %1733 = vmatprep.subr.mxu0 0.0
        %1734 = vmatpush1.msra.mxu0 0.0
        %1735 = vmatprep.subr.mxu0 0.0
        %1736 = vmatpush1.msra.mxu0 0.0
        %1737 = vmatprep.subr.mxu0 0.0
        %1738 = vmatpush1.msra.mxu0 0.0
        %1739 = vmatprep.subr.mxu0 0.0
        %1740 = vmatpush1.msra.mxu0 0.0
        %1741 = vmatprep.subr.mxu0 0.0
        %1742 = vmatpush1.msra.mxu0 0.0
        %1743 = vmatprep.subr.mxu0 0.0
        %1744 = vmatpush1.msra.mxu0 0.0
        %1745 = vmatprep.subr.mxu0 0.0
        %1746 = vmatpush1.msra.mxu0 0.0
        %1747 = vmatprep.subr.mxu0 0.0
        %1748 = vmatpush1.msra.mxu0 0.0
        %1749 = vmatprep.subr.mxu0 0.0
        %1750 = vmatpush1.msra.mxu0 0.0
        %1751 = vmatprep.subr.mxu0 0.0
        %1752 = vmatpush1.msra.mxu0 0.0
        %1753 = vmatprep.subr.mxu0 0.0
        %1754 = vmatpush1.msra.mxu0 0.0
        %1755 = vmatprep.subr.mxu0 0.0
        %1756 = vmatpush1.msra.mxu0 0.0
        %1757 = vmatprep.subr.mxu0 0.0
        %1758 = vmatpush1.msra.mxu0 0.0
        %1759 = vmatprep.subr.mxu0 0.0
        %1760 = vmatpush1.msra.mxu0 0.0
        %1761 = vmatprep.subr.mxu0 0.0
        %1762 = vmatpush1.msra.mxu0 0.0
        %1763 = vmatprep.subr.mxu0 0.0
        %1764 = vmatpush1.msra.mxu0 0.0
        %1765 = vmatprep.subr.mxu0 0.0
        %1766 = vmatpush1.msra.mxu0 0.0
        %1767 = vmatprep.subr.mxu0 0.0
        %1768 = vmatpush1.msra.mxu0 0.0
        %1769 = vmatprep.subr.mxu0 0.0
        %1770 = vmatpush1.msra.mxu0 0.0
        %1771 = vmatprep.subr.mxu0 0.0
        %1772 = vmatpush1.msra.mxu0 0.0
        %1773 = vmatprep.subr.mxu0 0.0
        %1774 = vmatpush1.msra.mxu0 0.0
        %1775 = vmatprep.subr.mxu0 0.0
        %1776 = vmatpush1.msra.mxu0 0.0
        %1777 = vmatprep.subr.mxu0 0.0
        %1778 = vmatpush1.msra.mxu0 0.0
        %1779 = vmatprep.subr.mxu0 0.0
        %1780 = vmatpush1.msra.mxu0 0.0
        %1781 = vmatprep.subr.mxu0 0.0
        %1782 = vmatpush1.msra.mxu0 0.0
        %1783 = vmatprep.mubr.f32.mxu0 0.0
        %v1784 = vand.u32 %v1034, 4294901760
        %v1785 = vsub.f32 %v1034, %v1784
        %1786 = vmatmul.mubr.f32.gmra.mrb[0].mxu0 %v1785
        %v1787 = vpop.f32.mrb[0].mxu0
        %v1788 = vadd.f32 %v1706, %v1787
        %v1789 = vpop.f32.mrb[0].mxu0
        %1790 = vmatprep.mubr.f32.mxu0 0.0
        %v1791 = vand.u32 %v1037, 4294901760
        %v1792 = vsub.f32 %v1037, %v1791
        %1793 = vmatmul.mubr.f32.gmra.mrb[0].mxu0 %v1792
        %v1794 = vpop.f32.mrb[0].mxu0
        %v1795 = vadd.f32 %v1712, %v1794
        %v1796 = vpop.f32.mrb[0].mxu0
        %1797 = vdwg.mxu0
        %1798 = vmatprep.subr.mxu0 0.0
        %v1799 = vand.u32 %v997, 4294901760
        %1800 = vmatpush1.msra.mxu0 %v1799
        %1801 = vmatprep.subr.mxu0 0.0
        %v1802 = vand.u32 %v1003, 4294901760
        %1803 = vmatpush1.msra.mxu0 %v1802
        %1804 = vmatprep.subr.mxu0 0.0
        %1805 = vmatpush1.msra.mxu0 0.0
        %1806 = vmatprep.subr.mxu0 0.0
        %1807 = vmatpush1.msra.mxu0 0.0
        %1808 = vmatprep.subr.mxu0 0.0
        %1809 = vmatpush1.msra.mxu0 0.0
        %1810 = vmatprep.subr.mxu0 0.0
        %1811 = vmatpush1.msra.mxu0 0.0
        %1812 = vmatprep.subr.mxu0 0.0
        %1813 = vmatpush1.msra.mxu0 0.0
        %1814 = vmatprep.subr.mxu0 0.0
        %1815 = vmatpush1.msra.mxu0 0.0
        %1816 = vmatprep.subr.mxu0 0.0
        %1817 = vmatpush1.msra.mxu0 0.0
        %1818 = vmatprep.subr.mxu0 0.0
        %1819 = vmatpush1.msra.mxu0 0.0
        %1820 = vmatprep.subr.mxu0 0.0
        %1821 = vmatpush1.msra.mxu0 0.0
        %1822 = vmatprep.subr.mxu0 0.0
        %1823 = vmatpush1.msra.mxu0 0.0
        %1824 = vmatprep.subr.mxu0 0.0
        %1825 = vmatpush1.msra.mxu0 0.0
        %1826 = vmatprep.subr.mxu0 0.0
        %1827 = vmatpush1.msra.mxu0 0.0
        %1828 = vmatprep.subr.mxu0 0.0
        %1829 = vmatpush1.msra.mxu0 0.0
        %1830 = vmatprep.subr.mxu0 0.0
        %1831 = vmatpush1.msra.mxu0 0.0
        %1832 = vmatprep.subr.mxu0 0.0
        %1833 = vmatpush1.msra.mxu0 0.0
        %1834 = vmatprep.subr.mxu0 0.0
        %1835 = vmatpush1.msra.mxu0 0.0
        %1836 = vmatprep.subr.mxu0 0.0
        %1837 = vmatpush1.msra.mxu0 0.0
        %1838 = vmatprep.subr.mxu0 0.0
        %1839 = vmatpush1.msra.mxu0 0.0
        %1840 = vmatprep.subr.mxu0 0.0
        %1841 = vmatpush1.msra.mxu0 0.0
        %1842 = vmatprep.subr.mxu0 0.0
        %1843 = vmatpush1.msra.mxu0 0.0
        %1844 = vmatprep.subr.mxu0 0.0
        %1845 = vmatpush1.msra.mxu0 0.0
        %1846 = vmatprep.subr.mxu0 0.0
        %1847 = vmatpush1.msra.mxu0 0.0
        %1848 = vmatprep.subr.mxu0 0.0
        %1849 = vmatpush1.msra.mxu0 0.0
        %1850 = vmatprep.subr.mxu0 0.0
        %1851 = vmatpush1.msra.mxu0 0.0
        %1852 = vmatprep.subr.mxu0 0.0
        %1853 = vmatpush1.msra.mxu0 0.0
        %1854 = vmatprep.subr.mxu0 0.0
        %1855 = vmatpush1.msra.mxu0 0.0
        %1856 = vmatprep.subr.mxu0 0.0
        %1857 = vmatpush1.msra.mxu0 0.0
        %1858 = vmatprep.subr.mxu0 0.0
        %1859 = vmatpush1.msra.mxu0 0.0
        %1860 = vmatprep.subr.mxu0 0.0
        %1861 = vmatpush1.msra.mxu0 0.0
        %1862 = vmatprep.subr.mxu0 0.0
        %1863 = vmatpush1.msra.mxu0 0.0
        %1864 = vmatprep.mubr.f32.mxu0 0.0
        %v1865 = vand.u32 %v1034, 4294901760
        %v1866 = vsub.f32 %v1034, %v1865
        %v1867 = vand.u32 %v1866, 4294901760
        %1868 = vmatmul.mubr.f32.gmra.mrb[0].mxu0 %v1867
        %v1869 = vpop.f32.mrb[0].mxu0
        %v1870 = vadd.f32 %v1788, %v1869
        %v1871 = vpop.f32.mrb[0].mxu0
        %1872 = vmatprep.mubr.f32.mxu0 0.0
        %v1873 = vand.u32 %v1037, 4294901760
        %v1874 = vsub.f32 %v1037, %v1873
        %v1875 = vand.u32 %v1874, 4294901760
        %1876 = vmatmul.mubr.f32.gmra.mrb[0].mxu0 %v1875
        %v1877 = vpop.f32.mrb[0].mxu0
        %v1878 = vadd.f32 %v1795, %v1877
        %v1879 = vpop.f32.mrb[0].mxu0
        %1880 = vdwg.mxu0
        %1881 = vmatprep.subr.mxu0 0.0
        %v1882 = vand.u32 %v997, 4294901760
        %v1883 = vsub.f32 %v997, %v1882
        %v1884 = vand.u32 %v1883, 4294901760
        %1885 = vmatpush1.msra.mxu0 %v1884
        %1886 = vmatprep.subr.mxu0 0.0
        %v1887 = vand.u32 %v1003, 4294901760
        %v1888 = vsub.f32 %v1003, %v1887
        %v1889 = vand.u32 %v1888, 4294901760
        %1890 = vmatpush1.msra.mxu0 %v1889
        %1891 = vmatprep.subr.mxu0 0.0
        %1892 = vmatpush1.msra.mxu0 0.0
        %1893 = vmatprep.subr.mxu0 0.0
        %1894 = vmatpush1.msra.mxu0 0.0
        %1895 = vmatprep.subr.mxu0 0.0
        %1896 = vmatpush1.msra.mxu0 0.0
        %1897 = vmatprep.subr.mxu0 0.0
        %1898 = vmatpush1.msra.mxu0 0.0
        %1899 = vmatprep.subr.mxu0 0.0
        %1900 = vmatpush1.msra.mxu0 0.0
        %1901 = vmatprep.subr.mxu0 0.0
        %1902 = vmatpush1.msra.mxu0 0.0
        %1903 = vmatprep.subr.mxu0 0.0
        %1904 = vmatpush1.msra.mxu0 0.0
        %1905 = vmatprep.subr.mxu0 0.0
        %1906 = vmatpush1.msra.mxu0 0.0
        %1907 = vmatprep.subr.mxu0 0.0
        %1908 = vmatpush1.msra.mxu0 0.0
        %1909 = vmatprep.subr.mxu0 0.0
        %1910 = vmatpush1.msra.mxu0 0.0
        %1911 = vmatprep.subr.mxu0 0.0
        %1912 = vmatpush1.msra.mxu0 0.0
        %1913 = vmatprep.subr.mxu0 0.0
        %1914 = vmatpush1.msra.mxu0 0.0
        %1915 = vmatprep.subr.mxu0 0.0
        %1916 = vmatpush1.msra.mxu0 0.0
        %1917 = vmatprep.subr.mxu0 0.0
        %1918 = vmatpush1.msra.mxu0 0.0
        %1919 = vmatprep.subr.mxu0 0.0
        %1920 = vmatpush1.msra.mxu0 0.0
        %1921 = vmatprep.subr.mxu0 0.0
        %1922 = vmatpush1.msra.mxu0 0.0
        %1923 = vmatprep.subr.mxu0 0.0
        %1924 = vmatpush1.msra.mxu0 0.0
        %1925 = vmatprep.subr.mxu0 0.0
        %1926 = vmatpush1.msra.mxu0 0.0
        %1927 = vmatprep.subr.mxu0 0.0
        %1928 = vmatpush1.msra.mxu0 0.0
        %1929 = vmatprep.subr.mxu0 0.0
        %1930 = vmatpush1.msra.mxu0 0.0
        %1931 = vmatprep.subr.mxu0 0.0
        %1932 = vmatpush1.msra.mxu0 0.0
        %1933 = vmatprep.subr.mxu0 0.0
        %1934 = vmatpush1.msra.mxu0 0.0
        %1935 = vmatprep.subr.mxu0 0.0
        %1936 = vmatpush1.msra.mxu0 0.0
        %1937 = vmatprep.subr.mxu0 0.0
        %1938 = vmatpush1.msra.mxu0 0.0
        %1939 = vmatprep.subr.mxu0 0.0
        %1940 = vmatpush1.msra.mxu0 0.0
        %1941 = vmatprep.subr.mxu0 0.0
        %1942 = vmatpush1.msra.mxu0 0.0
        %1943 = vmatprep.subr.mxu0 0.0
        %1944 = vmatpush1.msra.mxu0 0.0
        %1945 = vmatprep.subr.mxu0 0.0
        %1946 = vmatpush1.msra.mxu0 0.0
        %1947 = vmatprep.subr.mxu0 0.0
        %1948 = vmatpush1.msra.mxu0 0.0
        %1949 = vmatprep.subr.mxu0 0.0
        %1950 = vmatpush1.msra.mxu0 0.0
        %1951 = vmatprep.mubr.f32.mxu0 0.0
        %v1952 = vand.u32 %v1034, 4294901760
        %1953 = vmatmul.mubr.f32.gmra.mrb[0].mxu0 %v1952
        %v1954 = vpop.f32.mrb[0].mxu0
        %v1955 = vadd.f32 %v1870, %v1954
        %v1956 = vpop.f32.mrb[0].mxu0
        %1957 = vmatprep.mubr.f32.mxu0 0.0
        %v1958 = vand.u32 %v1037, 4294901760
        %1959 = vmatmul.mubr.f32.gmra.mrb[0].mxu0 %v1958
        %v1960 = vpop.f32.mrb[0].mxu0
        %v1961 = vadd.f32 %v1878, %v1960
        %v1962 = vpop.f32.mrb[0].mxu0
        %1963 = vdwg.mxu0
        %1964 = vmatprep.subr.mxu0 0.0
        %v1965 = vand.u32 %v997, 4294901760
        %1966 = vmatpush1.msra.mxu0 %v1965
        %1967 = vmatprep.subr.mxu0 0.0
        %v1968 = vand.u32 %v1003, 4294901760
        %1969 = vmatpush1.msra.mxu0 %v1968
        %1970 = vmatprep.subr.mxu0 0.0
        %1971 = vmatpush1.msra.mxu0 0.0
        %1972 = vmatprep.subr.mxu0 0.0
        %1973 = vmatpush1.msra.mxu0 0.0
        %1974 = vmatprep.subr.mxu0 0.0
        %1975 = vmatpush1.msra.mxu0 0.0
        %1976 = vmatprep.subr.mxu0 0.0
        %1977 = vmatpush1.msra.mxu0 0.0
        %1978 = vmatprep.subr.mxu0 0.0
        %1979 = vmatpush1.msra.mxu0 0.0
        %1980 = vmatprep.subr.mxu0 0.0
        %1981 = vmatpush1.msra.mxu0 0.0
        %1982 = vmatprep.subr.mxu0 0.0
        %1983 = vmatpush1.msra.mxu0 0.0
        %1984 = vmatprep.subr.mxu0 0.0
        %1985 = vmatpush1.msra.mxu0 0.0
        %1986 = vmatprep.subr.mxu0 0.0
        %1987 = vmatpush1.msra.mxu0 0.0
        %1988 = vmatprep.subr.mxu0 0.0
        %1989 = vmatpush1.msra.mxu0 0.0
        %1990 = vmatprep.subr.mxu0 0.0
        %1991 = vmatpush1.msra.mxu0 0.0
        %1992 = vmatprep.subr.mxu0 0.0
        %1993 = vmatpush1.msra.mxu0 0.0
        %1994 = vmatprep.subr.mxu0 0.0
        %1995 = vmatpush1.msra.mxu0 0.0
        %1996 = vmatprep.subr.mxu0 0.0
        %1997 = vmatpush1.msra.mxu0 0.0
        %1998 = vmatprep.subr.mxu0 0.0
        %1999 = vmatpush1.msra.mxu0 0.0
        %2000 = vmatprep.subr.mxu0 0.0
        %2001 = vmatpush1.msra.mxu0 0.0
        %2002 = vmatprep.subr.mxu0 0.0
        %2003 = vmatpush1.msra.mxu0 0.0
        %2004 = vmatprep.subr.mxu0 0.0
        %2005 = vmatpush1.msra.mxu0 0.0
        %2006 = vmatprep.subr.mxu0 0.0
        %2007 = vmatpush1.msra.mxu0 0.0
        %2008 = vmatprep.subr.mxu0 0.0
        %2009 = vmatpush1.msra.mxu0 0.0
        %2010 = vmatprep.subr.mxu0 0.0
        %2011 = vmatpush1.msra.mxu0 0.0
        %2012 = vmatprep.subr.mxu0 0.0
        %2013 = vmatpush1.msra.mxu0 0.0
        %2014 = vmatprep.subr.mxu0 0.0
        %2015 = vmatpush1.msra.mxu0 0.0
        %2016 = vmatprep.subr.mxu0 0.0
        %2017 = vmatpush1.msra.mxu0 0.0
        %2018 = vmatprep.subr.mxu0 0.0
        %2019 = vmatpush1.msra.mxu0 0.0
        %2020 = vmatprep.subr.mxu0 0.0
        %2021 = vmatpush1.msra.mxu0 0.0
        %2022 = vmatprep.subr.mxu0 0.0
        %2023 = vmatpush1.msra.mxu0 0.0
        %2024 = vmatprep.subr.mxu0 0.0
        %2025 = vmatpush1.msra.mxu0 0.0
        %2026 = vmatprep.subr.mxu0 0.0
        %2027 = vmatpush1.msra.mxu0 0.0
        %2028 = vmatprep.subr.mxu0 0.0
        %2029 = vmatpush1.msra.mxu0 0.0
        %2030 = vmatprep.mubr.f32.mxu0 0.0
        %v2031 = vand.u32 %v1034, 4294901760
        %2032 = vmatmul.mubr.f32.gmra.mrb[0].mxu0 %v2031
        %v2033 = vpop.f32.mrb[0].mxu0
        %v2034 = vadd.f32 %v1955, %v2033
        %v2035 = vpop.f32.mrb[0].mxu0
        %2036 = vmatprep.mubr.f32.mxu0 0.0
        %v2037 = vand.u32 %v1037, 4294901760
        %2038 = vmatmul.mubr.f32.gmra.mrb[0].mxu0 %v2037
        %v2039 = vpop.f32.mrb[0].mxu0
        %v2040 = vadd.f32 %v1961, %v2039
        %v2041 = vpop.f32.mrb[0].mxu0
        %2042 = vdwg.mxu0
        %2043 = vmatprep.subr.mxu0 0.0
        %v2044 = vand.u32 %v1009, 4294901760
        %2045 = vmatpush1.msra.mxu0 %v2044
        %2046 = vmatprep.subr.mxu0 0.0
        %v2047 = vand.u32 %v1015, 4294901760
        %2048 = vmatpush1.msra.mxu0 %v2047
        %2049 = vmatprep.subr.mxu0 0.0
        %2050 = vmatpush1.msra.mxu0 0.0
        %2051 = vmatprep.subr.mxu0 0.0
        %2052 = vmatpush1.msra.mxu0 0.0
        %2053 = vmatprep.subr.mxu0 0.0
        %2054 = vmatpush1.msra.mxu0 0.0
        %2055 = vmatprep.subr.mxu0 0.0
        %2056 = vmatpush1.msra.mxu0 0.0
        %2057 = vmatprep.subr.mxu0 0.0
        %2058 = vmatpush1.msra.mxu0 0.0
        %2059 = vmatprep.subr.mxu0 0.0
        %2060 = vmatpush1.msra.mxu0 0.0
        %2061 = vmatprep.subr.mxu0 0.0
        %2062 = vmatpush1.msra.mxu0 0.0
        %2063 = vmatprep.subr.mxu0 0.0
        %2064 = vmatpush1.msra.mxu0 0.0
        %2065 = vmatprep.subr.mxu0 0.0
        %2066 = vmatpush1.msra.mxu0 0.0
        %2067 = vmatprep.subr.mxu0 0.0
        %2068 = vmatpush1.msra.mxu0 0.0
        %2069 = vmatprep.subr.mxu0 0.0
        %2070 = vmatpush1.msra.mxu0 0.0
        %2071 = vmatprep.subr.mxu0 0.0
        %2072 = vmatpush1.msra.mxu0 0.0
        %2073 = vmatprep.subr.mxu0 0.0
        %2074 = vmatpush1.msra.mxu0 0.0
        %2075 = vmatprep.subr.mxu0 0.0
        %2076 = vmatpush1.msra.mxu0 0.0
        %2077 = vmatprep.subr.mxu0 0.0
        %2078 = vmatpush1.msra.mxu0 0.0
        %2079 = vmatprep.subr.mxu0 0.0
        %2080 = vmatpush1.msra.mxu0 0.0
        %2081 = vmatprep.subr.mxu0 0.0
        %2082 = vmatpush1.msra.mxu0 0.0
        %2083 = vmatprep.subr.mxu0 0.0
        %2084 = vmatpush1.msra.mxu0 0.0
        %2085 = vmatprep.subr.mxu0 0.0
        %2086 = vmatpush1.msra.mxu0 0.0
        %2087 = vmatprep.subr.mxu0 0.0
        %2088 = vmatpush1.msra.mxu0 0.0
        %2089 = vmatprep.subr.mxu0 0.0
        %2090 = vmatpush1.msra.mxu0 0.0
        %2091 = vmatprep.subr.mxu0 0.0
        %2092 = vmatpush1.msra.mxu0 0.0
        %2093 = vmatprep.subr.mxu0 0.0
        %2094 = vmatpush1.msra.mxu0 0.0
        %2095 = vmatprep.subr.mxu0 0.0
        %2096 = vmatpush1.msra.mxu0 0.0
        %2097 = vmatprep.subr.mxu0 0.0
        %2098 = vmatpush1.msra.mxu0 0.0
        %2099 = vmatprep.subr.mxu0 0.0
        %2100 = vmatpush1.msra.mxu0 0.0
        %2101 = vmatprep.subr.mxu0 0.0
        %2102 = vmatpush1.msra.mxu0 0.0
        %2103 = vmatprep.subr.mxu0 0.0
        %2104 = vmatpush1.msra.mxu0 0.0
        %2105 = vmatprep.subr.mxu0 0.0
        %2106 = vmatpush1.msra.mxu0 0.0
        %2107 = vmatprep.subr.mxu0 0.0
        %2108 = vmatpush1.msra.mxu0 0.0
        %2109 = vmatprep.mubr.f32.mxu0 0.0
        %v2110 = vand.u32 %v1034, 4294901760
        %v2111 = vsub.f32 %v1034, %v2110
        %v2112 = vand.u32 %v2111, 4294901760
        %v2113 = vsub.f32 %v2111, %v2112
        %v2114 = vand.u32 %v2113, 4294901760
        %2115 = vmatmul.mubr.f32.gmra.mrb[0].mxu0 %v2114
        %v2116 = vpop.f32.mrb[0].mxu0
        %v2117 = vadd.f32 0.0, %v2116
        %v2118 = vpop.f32.mrb[0].mxu0
        %2119 = vmatprep.mubr.f32.mxu0 0.0
        %v2120 = vand.u32 %v1037, 4294901760
        %v2121 = vsub.f32 %v1037, %v2120
        %v2122 = vand.u32 %v2121, 4294901760
        %v2123 = vsub.f32 %v2121, %v2122
        %v2124 = vand.u32 %v2123, 4294901760
        %2125 = vmatmul.mubr.f32.gmra.mrb[0].mxu0 %v2124
        %v2126 = vpop.f32.mrb[0].mxu0
        %v2127 = vadd.f32 0.0, %v2126
        %v2128 = vpop.f32.mrb[0].mxu0
        %2129 = vdwg.mxu0
        %2130 = vmatprep.subr.mxu0 0.0
        %v2131 = vand.u32 %v1009, 4294901760
        %v2132 = vsub.f32 %v1009, %v2131
        %v2133 = vand.u32 %v2132, 4294901760
        %v2134 = vsub.f32 %v2132, %v2133
        %v2135 = vand.u32 %v2134, 4294901760
        %2136 = vmatpush1.msra.mxu0 %v2135
        %2137 = vmatprep.subr.mxu0 0.0
        %v2138 = vand.u32 %v1015, 4294901760
        %v2139 = vsub.f32 %v1015, %v2138
        %v2140 = vand.u32 %v2139, 4294901760
        %v2141 = vsub.f32 %v2139, %v2140
        %v2142 = vand.u32 %v2141, 4294901760
        %2143 = vmatpush1.msra.mxu0 %v2142
        %2144 = vmatprep.subr.mxu0 0.0
        %2145 = vmatpush1.msra.mxu0 0.0
        %2146 = vmatprep.subr.mxu0 0.0
        %2147 = vmatpush1.msra.mxu0 0.0
        %2148 = vmatprep.subr.mxu0 0.0
        %2149 = vmatpush1.msra.mxu0 0.0
        %2150 = vmatprep.subr.mxu0 0.0
        %2151 = vmatpush1.msra.mxu0 0.0
        %2152 = vmatprep.subr.mxu0 0.0
        %2153 = vmatpush1.msra.mxu0 0.0
        %2154 = vmatprep.subr.mxu0 0.0
        %2155 = vmatpush1.msra.mxu0 0.0
        %2156 = vmatprep.subr.mxu0 0.0
        %2157 = vmatpush1.msra.mxu0 0.0
        %2158 = vmatprep.subr.mxu0 0.0
        %2159 = vmatpush1.msra.mxu0 0.0
        %2160 = vmatprep.subr.mxu0 0.0
        %2161 = vmatpush1.msra.mxu0 0.0
        %2162 = vmatprep.subr.mxu0 0.0
        %2163 = vmatpush1.msra.mxu0 0.0
        %2164 = vmatprep.subr.mxu0 0.0
        %2165 = vmatpush1.msra.mxu0 0.0
        %2166 = vmatprep.subr.mxu0 0.0
        %2167 = vmatpush1.msra.mxu0 0.0
        %2168 = vmatprep.subr.mxu0 0.0
        %2169 = vmatpush1.msra.mxu0 0.0
        %2170 = vmatprep.subr.mxu0 0.0
        %2171 = vmatpush1.msra.mxu0 0.0
        %2172 = vmatprep.subr.mxu0 0.0
        %2173 = vmatpush1.msra.mxu0 0.0
        %2174 = vmatprep.subr.mxu0 0.0
        %2175 = vmatpush1.msra.mxu0 0.0
        %2176 = vmatprep.subr.mxu0 0.0
        %2177 = vmatpush1.msra.mxu0 0.0
        %2178 = vmatprep.subr.mxu0 0.0
        %2179 = vmatpush1.msra.mxu0 0.0
        %2180 = vmatprep.subr.mxu0 0.0
        %2181 = vmatpush1.msra.mxu0 0.0
        %2182 = vmatprep.subr.mxu0 0.0
        %2183 = vmatpush1.msra.mxu0 0.0
        %2184 = vmatprep.subr.mxu0 0.0
        %2185 = vmatpush1.msra.mxu0 0.0
        %2186 = vmatprep.subr.mxu0 0.0
        %2187 = vmatpush1.msra.mxu0 0.0
        %2188 = vmatprep.subr.mxu0 0.0
        %2189 = vmatpush1.msra.mxu0 0.0
        %2190 = vmatprep.subr.mxu0 0.0
        %2191 = vmatpush1.msra.mxu0 0.0
        %2192 = vmatprep.subr.mxu0 0.0
        %2193 = vmatpush1.msra.mxu0 0.0
        %2194 = vmatprep.subr.mxu0 0.0
        %2195 = vmatpush1.msra.mxu0 0.0
        %2196 = vmatprep.subr.mxu0 0.0
        %2197 = vmatpush1.msra.mxu0 0.0
        %2198 = vmatprep.subr.mxu0 0.0
        %2199 = vmatpush1.msra.mxu0 0.0
        %2200 = vmatprep.subr.mxu0 0.0
        %2201 = vmatpush1.msra.mxu0 0.0
        %2202 = vmatprep.subr.mxu0 0.0
        %2203 = vmatpush1.msra.mxu0 0.0
        %2204 = vmatprep.mubr.f32.mxu0 0.0
        %v2205 = vand.u32 %v1034, 4294901760
        %2206 = vmatmul.mubr.f32.gmra.mrb[0].mxu0 %v2205
        %v2207 = vpop.f32.mrb[0].mxu0
        %v2208 = vadd.f32 %v2117, %v2207
        %v2209 = vpop.f32.mrb[0].mxu0
        %2210 = vmatprep.mubr.f32.mxu0 0.0
        %v2211 = vand.u32 %v1037, 4294901760
        %2212 = vmatmul.mubr.f32.gmra.mrb[0].mxu0 %v2211
        %v2213 = vpop.f32.mrb[0].mxu0
        %v2214 = vadd.f32 %v2127, %v2213
        %v2215 = vpop.f32.mrb[0].mxu0
        %2216 = vdwg.mxu0
        %2217 = vmatprep.subr.mxu0 0.0
        %v2218 = vand.u32 %v1009, 4294901760
        %v2219 = vsub.f32 %v1009, %v2218
        %2220 = vmatpush1.msra.mxu0 %v2219
        %2221 = vmatprep.subr.mxu0 0.0
        %v2222 = vand.u32 %v1015, 4294901760
        %v2223 = vsub.f32 %v1015, %v2222
        %2224 = vmatpush1.msra.mxu0 %v2223
        %2225 = vmatprep.subr.mxu0 0.0
        %2226 = vmatpush1.msra.mxu0 0.0
        %2227 = vmatprep.subr.mxu0 0.0
        %2228 = vmatpush1.msra.mxu0 0.0
        %2229 = vmatprep.subr.mxu0 0.0
        %2230 = vmatpush1.msra.mxu0 0.0
        %2231 = vmatprep.subr.mxu0 0.0
        %2232 = vmatpush1.msra.mxu0 0.0
        %2233 = vmatprep.subr.mxu0 0.0
        %2234 = vmatpush1.msra.mxu0 0.0
        %2235 = vmatprep.subr.mxu0 0.0
        %2236 = vmatpush1.msra.mxu0 0.0
        %2237 = vmatprep.subr.mxu0 0.0
        %2238 = vmatpush1.msra.mxu0 0.0
        %2239 = vmatprep.subr.mxu0 0.0
        %2240 = vmatpush1.msra.mxu0 0.0
        %2241 = vmatprep.subr.mxu0 0.0
        %2242 = vmatpush1.msra.mxu0 0.0
        %2243 = vmatprep.subr.mxu0 0.0
        %2244 = vmatpush1.msra.mxu0 0.0
        %2245 = vmatprep.subr.mxu0 0.0
        %2246 = vmatpush1.msra.mxu0 0.0
        %2247 = vmatprep.subr.mxu0 0.0
        %2248 = vmatpush1.msra.mxu0 0.0
        %2249 = vmatprep.subr.mxu0 0.0
        %2250 = vmatpush1.msra.mxu0 0.0
        %2251 = vmatprep.subr.mxu0 0.0
        %2252 = vmatpush1.msra.mxu0 0.0
        %2253 = vmatprep.subr.mxu0 0.0
        %2254 = vmatpush1.msra.mxu0 0.0
        %2255 = vmatprep.subr.mxu0 0.0
        %2256 = vmatpush1.msra.mxu0 0.0
        %2257 = vmatprep.subr.mxu0 0.0
        %2258 = vmatpush1.msra.mxu0 0.0
        %2259 = vmatprep.subr.mxu0 0.0
        %2260 = vmatpush1.msra.mxu0 0.0
        %2261 = vmatprep.subr.mxu0 0.0
        %2262 = vmatpush1.msra.mxu0 0.0
        %2263 = vmatprep.subr.mxu0 0.0
        %2264 = vmatpush1.msra.mxu0 0.0
        %2265 = vmatprep.subr.mxu0 0.0
        %2266 = vmatpush1.msra.mxu0 0.0
        %2267 = vmatprep.subr.mxu0 0.0
        %2268 = vmatpush1.msra.mxu0 0.0
        %2269 = vmatprep.subr.mxu0 0.0
        %2270 = vmatpush1.msra.mxu0 0.0
        %2271 = vmatprep.subr.mxu0 0.0
        %2272 = vmatpush1.msra.mxu0 0.0
        %2273 = vmatprep.subr.mxu0 0.0
        %2274 = vmatpush1.msra.mxu0 0.0
        %2275 = vmatprep.subr.mxu0 0.0
        %2276 = vmatpush1.msra.mxu0 0.0
        %2277 = vmatprep.subr.mxu0 0.0
        %2278 = vmatpush1.msra.mxu0 0.0
        %2279 = vmatprep.subr.mxu0 0.0
        %2280 = vmatpush1.msra.mxu0 0.0
        %2281 = vmatprep.subr.mxu0 0.0
        %2282 = vmatpush1.msra.mxu0 0.0
        %2283 = vmatprep.subr.mxu0 0.0
        %2284 = vmatpush1.msra.mxu0 0.0
        %2285 = vmatprep.mubr.f32.mxu0 0.0
        %v2286 = vand.u32 %v1034, 4294901760
        %v2287 = vsub.f32 %v1034, %v2286
        %2288 = vmatmul.mubr.f32.gmra.mrb[0].mxu0 %v2287
        %v2289 = vpop.f32.mrb[0].mxu0
        %v2290 = vadd.f32 %v2208, %v2289
        %v2291 = vpop.f32.mrb[0].mxu0
        %2292 = vmatprep.mubr.f32.mxu0 0.0
        %v2293 = vand.u32 %v1037, 4294901760
        %v2294 = vsub.f32 %v1037, %v2293
        %2295 = vmatmul.mubr.f32.gmra.mrb[0].mxu0 %v2294
        %v2296 = vpop.f32.mrb[0].mxu0
        %v2297 = vadd.f32 %v2214, %v2296
        %v2298 = vpop.f32.mrb[0].mxu0
        %2299 = vdwg.mxu0
        %2300 = vmatprep.subr.mxu0 0.0
        %v2301 = vand.u32 %v1009, 4294901760
        %2302 = vmatpush1.msra.mxu0 %v2301
        %2303 = vmatprep.subr.mxu0 0.0
        %v2304 = vand.u32 %v1015, 4294901760
        %2305 = vmatpush1.msra.mxu0 %v2304
        %2306 = vmatprep.subr.mxu0 0.0
        %2307 = vmatpush1.msra.mxu0 0.0
        %2308 = vmatprep.subr.mxu0 0.0
        %2309 = vmatpush1.msra.mxu0 0.0
        %2310 = vmatprep.subr.mxu0 0.0
        %2311 = vmatpush1.msra.mxu0 0.0
        %2312 = vmatprep.subr.mxu0 0.0
        %2313 = vmatpush1.msra.mxu0 0.0
        %2314 = vmatprep.subr.mxu0 0.0
        %2315 = vmatpush1.msra.mxu0 0.0
        %2316 = vmatprep.subr.mxu0 0.0
        %2317 = vmatpush1.msra.mxu0 0.0
        %2318 = vmatprep.subr.mxu0 0.0
        %2319 = vmatpush1.msra.mxu0 0.0
        %2320 = vmatprep.subr.mxu0 0.0
        %2321 = vmatpush1.msra.mxu0 0.0
        %2322 = vmatprep.subr.mxu0 0.0
        %2323 = vmatpush1.msra.mxu0 0.0
        %2324 = vmatprep.subr.mxu0 0.0
        %2325 = vmatpush1.msra.mxu0 0.0
        %2326 = vmatprep.subr.mxu0 0.0
        %2327 = vmatpush1.msra.mxu0 0.0
        %2328 = vmatprep.subr.mxu0 0.0
        %2329 = vmatpush1.msra.mxu0 0.0
        %2330 = vmatprep.subr.mxu0 0.0
        %2331 = vmatpush1.msra.mxu0 0.0
        %2332 = vmatprep.subr.mxu0 0.0
        %2333 = vmatpush1.msra.mxu0 0.0
        %2334 = vmatprep.subr.mxu0 0.0
        %2335 = vmatpush1.msra.mxu0 0.0
        %2336 = vmatprep.subr.mxu0 0.0
        %2337 = vmatpush1.msra.mxu0 0.0
        %2338 = vmatprep.subr.mxu0 0.0
        %2339 = vmatpush1.msra.mxu0 0.0
        %2340 = vmatprep.subr.mxu0 0.0
        %2341 = vmatpush1.msra.mxu0 0.0
        %2342 = vmatprep.subr.mxu0 0.0
        %2343 = vmatpush1.msra.mxu0 0.0
        %2344 = vmatprep.subr.mxu0 0.0
        %2345 = vmatpush1.msra.mxu0 0.0
        %2346 = vmatprep.subr.mxu0 0.0
        %2347 = vmatpush1.msra.mxu0 0.0
        %2348 = vmatprep.subr.mxu0 0.0
        %2349 = vmatpush1.msra.mxu0 0.0
        %2350 = vmatprep.subr.mxu0 0.0
        %2351 = vmatpush1.msra.mxu0 0.0
        %2352 = vmatprep.subr.mxu0 0.0
        %2353 = vmatpush1.msra.mxu0 0.0
        %2354 = vmatprep.subr.mxu0 0.0
        %2355 = vmatpush1.msra.mxu0 0.0
        %2356 = vmatprep.subr.mxu0 0.0
        %2357 = vmatpush1.msra.mxu0 0.0
        %2358 = vmatprep.subr.mxu0 0.0
        %2359 = vmatpush1.msra.mxu0 0.0
        %2360 = vmatprep.subr.mxu0 0.0
        %2361 = vmatpush1.msra.mxu0 0.0
        %2362 = vmatprep.subr.mxu0 0.0
        %2363 = vmatpush1.msra.mxu0 0.0
        %2364 = vmatprep.subr.mxu0 0.0
        %2365 = vmatpush1.msra.mxu0 0.0
        %2366 = vmatprep.mubr.f32.mxu0 0.0
        %v2367 = vand.u32 %v1034, 4294901760
        %v2368 = vsub.f32 %v1034, %v2367
        %v2369 = vand.u32 %v2368, 4294901760
        %2370 = vmatmul.mubr.f32.gmra.mrb[0].mxu0 %v2369
        %v2371 = vpop.f32.mrb[0].mxu0
        %v2372 = vadd.f32 %v2290, %v2371
        %v2373 = vpop.f32.mrb[0].mxu0
        %2374 = vmatprep.mubr.f32.mxu0 0.0
        %v2375 = vand.u32 %v1037, 4294901760
        %v2376 = vsub.f32 %v1037, %v2375
        %v2377 = vand.u32 %v2376, 4294901760
        %2378 = vmatmul.mubr.f32.gmra.mrb[0].mxu0 %v2377
        %v2379 = vpop.f32.mrb[0].mxu0
        %v2380 = vadd.f32 %v2297, %v2379
        %v2381 = vpop.f32.mrb[0].mxu0
        %2382 = vdwg.mxu0
        %2383 = vmatprep.subr.mxu0 0.0
        %v2384 = vand.u32 %v1009, 4294901760
        %v2385 = vsub.f32 %v1009, %v2384
        %v2386 = vand.u32 %v2385, 4294901760
        %2387 = vmatpush1.msra.mxu0 %v2386
        %2388 = vmatprep.subr.mxu0 0.0
        %v2389 = vand.u32 %v1015, 4294901760
        %v2390 = vsub.f32 %v1015, %v2389
        %v2391 = vand.u32 %v2390, 4294901760
        %2392 = vmatpush1.msra.mxu0 %v2391
        %2393 = vmatprep.subr.mxu0 0.0
        %2394 = vmatpush1.msra.mxu0 0.0
        %2395 = vmatprep.subr.mxu0 0.0
        %2396 = vmatpush1.msra.mxu0 0.0
        %2397 = vmatprep.subr.mxu0 0.0
        %2398 = vmatpush1.msra.mxu0 0.0
        %2399 = vmatprep.subr.mxu0 0.0
        %2400 = vmatpush1.msra.mxu0 0.0
        %2401 = vmatprep.subr.mxu0 0.0
        %2402 = vmatpush1.msra.mxu0 0.0
        %2403 = vmatprep.subr.mxu0 0.0
        %2404 = vmatpush1.msra.mxu0 0.0
        %2405 = vmatprep.subr.mxu0 0.0
        %2406 = vmatpush1.msra.mxu0 0.0
        %2407 = vmatprep.subr.mxu0 0.0
        %2408 = vmatpush1.msra.mxu0 0.0
        %2409 = vmatprep.subr.mxu0 0.0
        %2410 = vmatpush1.msra.mxu0 0.0
        %2411 = vmatprep.subr.mxu0 0.0
        %2412 = vmatpush1.msra.mxu0 0.0
        %2413 = vmatprep.subr.mxu0 0.0
        %2414 = vmatpush1.msra.mxu0 0.0
        %2415 = vmatprep.subr.mxu0 0.0
        %2416 = vmatpush1.msra.mxu0 0.0
        %2417 = vmatprep.subr.mxu0 0.0
        %2418 = vmatpush1.msra.mxu0 0.0
        %2419 = vmatprep.subr.mxu0 0.0
        %2420 = vmatpush1.msra.mxu0 0.0
        %2421 = vmatprep.subr.mxu0 0.0
        %2422 = vmatpush1.msra.mxu0 0.0
        %2423 = vmatprep.subr.mxu0 0.0
        %2424 = vmatpush1.msra.mxu0 0.0
        %2425 = vmatprep.subr.mxu0 0.0
        %2426 = vmatpush1.msra.mxu0 0.0
        %2427 = vmatprep.subr.mxu0 0.0
        %2428 = vmatpush1.msra.mxu0 0.0
        %2429 = vmatprep.subr.mxu0 0.0
        %2430 = vmatpush1.msra.mxu0 0.0
        %2431 = vmatprep.subr.mxu0 0.0
        %2432 = vmatpush1.msra.mxu0 0.0
        %2433 = vmatprep.subr.mxu0 0.0
        %2434 = vmatpush1.msra.mxu0 0.0
        %2435 = vmatprep.subr.mxu0 0.0
        %2436 = vmatpush1.msra.mxu0 0.0
        %2437 = vmatprep.subr.mxu0 0.0
        %2438 = vmatpush1.msra.mxu0 0.0
        %2439 = vmatprep.subr.mxu0 0.0
        %2440 = vmatpush1.msra.mxu0 0.0
        %2441 = vmatprep.subr.mxu0 0.0
        %2442 = vmatpush1.msra.mxu0 0.0
        %2443 = vmatprep.subr.mxu0 0.0
        %2444 = vmatpush1.msra.mxu0 0.0
        %2445 = vmatprep.subr.mxu0 0.0
        %2446 = vmatpush1.msra.mxu0 0.0
        %2447 = vmatprep.subr.mxu0 0.0
        %2448 = vmatpush1.msra.mxu0 0.0
        %2449 = vmatprep.subr.mxu0 0.0
        %2450 = vmatpush1.msra.mxu0 0.0
        %2451 = vmatprep.subr.mxu0 0.0
        %2452 = vmatpush1.msra.mxu0 0.0
        %2453 = vmatprep.mubr.f32.mxu0 0.0
        %v2454 = vand.u32 %v1034, 4294901760
        %2455 = vmatmul.mubr.f32.gmra.mrb[0].mxu0 %v2454
        %v2456 = vpop.f32.mrb[0].mxu0
        %v2457 = vadd.f32 %v2372, %v2456
        %v2458 = vpop.f32.mrb[0].mxu0
        %2459 = vmatprep.mubr.f32.mxu0 0.0
        %v2460 = vand.u32 %v1037, 4294901760
        %2461 = vmatmul.mubr.f32.gmra.mrb[0].mxu0 %v2460
        %v2462 = vpop.f32.mrb[0].mxu0
        %v2463 = vadd.f32 %v2380, %v2462
        %v2464 = vpop.f32.mrb[0].mxu0
        %2465 = vdwg.mxu0
        %2466 = vmatprep.subr.mxu0 0.0
        %v2467 = vand.u32 %v1009, 4294901760
        %2468 = vmatpush1.msra.mxu0 %v2467
        %2469 = vmatprep.subr.mxu0 0.0
        %v2470 = vand.u32 %v1015, 4294901760
        %2471 = vmatpush1.msra.mxu0 %v2470
        %2472 = vmatprep.subr.mxu0 0.0
        %2473 = vmatpush1.msra.mxu0 0.0
        %2474 = vmatprep.subr.mxu0 0.0
        %2475 = vmatpush1.msra.mxu0 0.0
        %2476 = vmatprep.subr.mxu0 0.0
        %2477 = vmatpush1.msra.mxu0 0.0
        %2478 = vmatprep.subr.mxu0 0.0
        %2479 = vmatpush1.msra.mxu0 0.0
        %2480 = vmatprep.subr.mxu0 0.0
        %2481 = vmatpush1.msra.mxu0 0.0
        %2482 = vmatprep.subr.mxu0 0.0
        %2483 = vmatpush1.msra.mxu0 0.0
        %2484 = vmatprep.subr.mxu0 0.0
        %2485 = vmatpush1.msra.mxu0 0.0
        %2486 = vmatprep.subr.mxu0 0.0
        %2487 = vmatpush1.msra.mxu0 0.0
        %2488 = vmatprep.subr.mxu0 0.0
        %2489 = vmatpush1.msra.mxu0 0.0
        %2490 = vmatprep.subr.mxu0 0.0
        %2491 = vmatpush1.msra.mxu0 0.0
        %2492 = vmatprep.subr.mxu0 0.0
        %2493 = vmatpush1.msra.mxu0 0.0
        %2494 = vmatprep.subr.mxu0 0.0
        %2495 = vmatpush1.msra.mxu0 0.0
        %2496 = vmatprep.subr.mxu0 0.0
        %2497 = vmatpush1.msra.mxu0 0.0
        %2498 = vmatprep.subr.mxu0 0.0
        %2499 = vmatpush1.msra.mxu0 0.0
        %2500 = vmatprep.subr.mxu0 0.0
        %2501 = vmatpush1.msra.mxu0 0.0
        %2502 = vmatprep.subr.mxu0 0.0
        %2503 = vmatpush1.msra.mxu0 0.0
        %2504 = vmatprep.subr.mxu0 0.0
        %2505 = vmatpush1.msra.mxu0 0.0
        %2506 = vmatprep.subr.mxu0 0.0
        %2507 = vmatpush1.msra.mxu0 0.0
        %2508 = vmatprep.subr.mxu0 0.0
        %2509 = vmatpush1.msra.mxu0 0.0
        %2510 = vmatprep.subr.mxu0 0.0
        %2511 = vmatpush1.msra.mxu0 0.0
        %2512 = vmatprep.subr.mxu0 0.0
        %2513 = vmatpush1.msra.mxu0 0.0
        %2514 = vmatprep.subr.mxu0 0.0
        %2515 = vmatpush1.msra.mxu0 0.0
        %2516 = vmatprep.subr.mxu0 0.0
        %2517 = vmatpush1.msra.mxu0 0.0
        %2518 = vmatprep.subr.mxu0 0.0
        %2519 = vmatpush1.msra.mxu0 0.0
        %2520 = vmatprep.subr.mxu0 0.0
        %2521 = vmatpush1.msra.mxu0 0.0
        %2522 = vmatprep.subr.mxu0 0.0
        %2523 = vmatpush1.msra.mxu0 0.0
        %2524 = vmatprep.subr.mxu0 0.0
        %2525 = vmatpush1.msra.mxu0 0.0
        %2526 = vmatprep.subr.mxu0 0.0
        %2527 = vmatpush1.msra.mxu0 0.0
        %2528 = vmatprep.subr.mxu0 0.0
        %2529 = vmatpush1.msra.mxu0 0.0
        %2530 = vmatprep.subr.mxu0 0.0
        %2531 = vmatpush1.msra.mxu0 0.0
        %2532 = vmatprep.mubr.f32.mxu0 0.0
        %v2533 = vand.u32 %v1034, 4294901760
        %2534 = vmatmul.mubr.f32.gmra.mrb[0].mxu0 %v2533
        %v2535 = vpop.f32.mrb[0].mxu0
        %v2536 = vadd.f32 %v2457, %v2535
        %v2537 = vpop.f32.mrb[0].mxu0
        %2538 = vmatprep.mubr.f32.mxu0 0.0
        %v2539 = vand.u32 %v1037, 4294901760
        %2540 = vmatmul.mubr.f32.gmra.mrb[0].mxu0 %v2539
        %v2541 = vpop.f32.mrb[0].mxu0
        %v2542 = vadd.f32 %v2463, %v2541
        %v2543 = vpop.f32.mrb[0].mxu0
        %2544 = vdwg.mxu0
        %2545 = vmatprep.subr.mxu0 0.0
        %v2546 = vand.u32 %v1021, 4294901760
        %2547 = vmatpush1.msra.mxu0 %v2546
        %2548 = vmatprep.subr.mxu0 0.0
        %v2549 = vand.u32 %v1027, 4294901760
        %2550 = vmatpush1.msra.mxu0 %v2549
        %2551 = vmatprep.subr.mxu0 0.0
        %2552 = vmatpush1.msra.mxu0 0.0
        %2553 = vmatprep.subr.mxu0 0.0
        %2554 = vmatpush1.msra.mxu0 0.0
        %2555 = vmatprep.subr.mxu0 0.0
        %2556 = vmatpush1.msra.mxu0 0.0
        %2557 = vmatprep.subr.mxu0 0.0
        %2558 = vmatpush1.msra.mxu0 0.0
        %2559 = vmatprep.subr.mxu0 0.0
        %2560 = vmatpush1.msra.mxu0 0.0
        %2561 = vmatprep.subr.mxu0 0.0
        %2562 = vmatpush1.msra.mxu0 0.0
        %2563 = vmatprep.subr.mxu0 0.0
        %2564 = vmatpush1.msra.mxu0 0.0
        %2565 = vmatprep.subr.mxu0 0.0
        %2566 = vmatpush1.msra.mxu0 0.0
        %2567 = vmatprep.subr.mxu0 0.0
        %2568 = vmatpush1.msra.mxu0 0.0
        %2569 = vmatprep.subr.mxu0 0.0
        %2570 = vmatpush1.msra.mxu0 0.0
        %2571 = vmatprep.subr.mxu0 0.0
        %2572 = vmatpush1.msra.mxu0 0.0
        %2573 = vmatprep.subr.mxu0 0.0
        %2574 = vmatpush1.msra.mxu0 0.0
        %2575 = vmatprep.subr.mxu0 0.0
        %2576 = vmatpush1.msra.mxu0 0.0
        %2577 = vmatprep.subr.mxu0 0.0
        %2578 = vmatpush1.msra.mxu0 0.0
        %2579 = vmatprep.subr.mxu0 0.0
        %2580 = vmatpush1.msra.mxu0 0.0
        %2581 = vmatprep.subr.mxu0 0.0
        %2582 = vmatpush1.msra.mxu0 0.0
        %2583 = vmatprep.subr.mxu0 0.0
        %2584 = vmatpush1.msra.mxu0 0.0
        %2585 = vmatprep.subr.mxu0 0.0
        %2586 = vmatpush1.msra.mxu0 0.0
        %2587 = vmatprep.subr.mxu0 0.0
        %2588 = vmatpush1.msra.mxu0 0.0
        %2589 = vmatprep.subr.mxu0 0.0
        %2590 = vmatpush1.msra.mxu0 0.0
        %2591 = vmatprep.subr.mxu0 0.0
        %2592 = vmatpush1.msra.mxu0 0.0
        %2593 = vmatprep.subr.mxu0 0.0
        %2594 = vmatpush1.msra.mxu0 0.0
        %2595 = vmatprep.subr.mxu0 0.0
        %2596 = vmatpush1.msra.mxu0 0.0
        %2597 = vmatprep.subr.mxu0 0.0
        %2598 = vmatpush1.msra.mxu0 0.0
        %2599 = vmatprep.subr.mxu0 0.0
        %2600 = vmatpush1.msra.mxu0 0.0
        %2601 = vmatprep.subr.mxu0 0.0
        %2602 = vmatpush1.msra.mxu0 0.0
        %2603 = vmatprep.subr.mxu0 0.0
        %2604 = vmatpush1.msra.mxu0 0.0
        %2605 = vmatprep.subr.mxu0 0.0
        %2606 = vmatpush1.msra.mxu0 0.0
        %2607 = vmatprep.subr.mxu0 0.0
        %2608 = vmatpush1.msra.mxu0 0.0
        %2609 = vmatprep.subr.mxu0 0.0
        %2610 = vmatpush1.msra.mxu0 0.0
        %2611 = vmatprep.mubr.f32.mxu0 0.0
        %v2612 = vand.u32 %v1034, 4294901760
        %v2613 = vsub.f32 %v1034, %v2612
        %v2614 = vand.u32 %v2613, 4294901760
        %v2615 = vsub.f32 %v2613, %v2614
        %v2616 = vand.u32 %v2615, 4294901760
        %2617 = vmatmul.mubr.f32.gmra.mrb[0].mxu0 %v2616
        %v2618 = vpop.f32.mrb[0].mxu0
        %v2619 = vadd.f32 0.0, %v2618
        %v2620 = vpop.f32.mrb[0].mxu0
        %2621 = vmatprep.mubr.f32.mxu0 0.0
        %v2622 = vand.u32 %v1037, 4294901760
        %v2623 = vsub.f32 %v1037, %v2622
        %v2624 = vand.u32 %v2623, 4294901760
        %v2625 = vsub.f32 %v2623, %v2624
        %v2626 = vand.u32 %v2625, 4294901760
        %2627 = vmatmul.mubr.f32.gmra.mrb[0].mxu0 %v2626
        %v2628 = vpop.f32.mrb[0].mxu0
        %v2629 = vadd.f32 0.0, %v2628
        %v2630 = vpop.f32.mrb[0].mxu0
        %2631 = vdwg.mxu0
        %2632 = vmatprep.subr.mxu0 0.0
        %v2633 = vand.u32 %v1021, 4294901760
        %v2634 = vsub.f32 %v1021, %v2633
        %v2635 = vand.u32 %v2634, 4294901760
        %v2636 = vsub.f32 %v2634, %v2635
        %v2637 = vand.u32 %v2636, 4294901760
        %2638 = vmatpush1.msra.mxu0 %v2637
        %2639 = vmatprep.subr.mxu0 0.0
        %v2640 = vand.u32 %v1027, 4294901760
        %v2641 = vsub.f32 %v1027, %v2640
        %v2642 = vand.u32 %v2641, 4294901760
        %v2643 = vsub.f32 %v2641, %v2642
        %v2644 = vand.u32 %v2643, 4294901760
        %2645 = vmatpush1.msra.mxu0 %v2644
        %2646 = vmatprep.subr.mxu0 0.0
        %2647 = vmatpush1.msra.mxu0 0.0
        %2648 = vmatprep.subr.mxu0 0.0
        %2649 = vmatpush1.msra.mxu0 0.0
        %2650 = vmatprep.subr.mxu0 0.0
        %2651 = vmatpush1.msra.mxu0 0.0
        %2652 = vmatprep.subr.mxu0 0.0
        %2653 = vmatpush1.msra.mxu0 0.0
        %2654 = vmatprep.subr.mxu0 0.0
        %2655 = vmatpush1.msra.mxu0 0.0
        %2656 = vmatprep.subr.mxu0 0.0
        %2657 = vmatpush1.msra.mxu0 0.0
        %2658 = vmatprep.subr.mxu0 0.0
        %2659 = vmatpush1.msra.mxu0 0.0
        %2660 = vmatprep.subr.mxu0 0.0
        %2661 = vmatpush1.msra.mxu0 0.0
        %2662 = vmatprep.subr.mxu0 0.0
        %2663 = vmatpush1.msra.mxu0 0.0
        %2664 = vmatprep.subr.mxu0 0.0
        %2665 = vmatpush1.msra.mxu0 0.0
        %2666 = vmatprep.subr.mxu0 0.0
        %2667 = vmatpush1.msra.mxu0 0.0
        %2668 = vmatprep.subr.mxu0 0.0
        %2669 = vmatpush1.msra.mxu0 0.0
        %2670 = vmatprep.subr.mxu0 0.0
        %2671 = vmatpush1.msra.mxu0 0.0
        %2672 = vmatprep.subr.mxu0 0.0
        %2673 = vmatpush1.msra.mxu0 0.0
        %2674 = vmatprep.subr.mxu0 0.0
        %2675 = vmatpush1.msra.mxu0 0.0
        %2676 = vmatprep.subr.mxu0 0.0
        %2677 = vmatpush1.msra.mxu0 0.0
        %2678 = vmatprep.subr.mxu0 0.0
        %2679 = vmatpush1.msra.mxu0 0.0
        %2680 = vmatprep.subr.mxu0 0.0
        %2681 = vmatpush1.msra.mxu0 0.0
        %2682 = vmatprep.subr.mxu0 0.0
        %2683 = vmatpush1.msra.mxu0 0.0
        %2684 = vmatprep.subr.mxu0 0.0
        %2685 = vmatpush1.msra.mxu0 0.0
        %2686 = vmatprep.subr.mxu0 0.0
        %2687 = vmatpush1.msra.mxu0 0.0
        %2688 = vmatprep.subr.mxu0 0.0
        %2689 = vmatpush1.msra.mxu0 0.0
        %2690 = vmatprep.subr.mxu0 0.0
        %2691 = vmatpush1.msra.mxu0 0.0
        %2692 = vmatprep.subr.mxu0 0.0
        %2693 = vmatpush1.msra.mxu0 0.0
        %2694 = vmatprep.subr.mxu0 0.0
        %2695 = vmatpush1.msra.mxu0 0.0
        %2696 = vmatprep.subr.mxu0 0.0
        %2697 = vmatpush1.msra.mxu0 0.0
        %2698 = vmatprep.subr.mxu0 0.0
        %2699 = vmatpush1.msra.mxu0 0.0
        %2700 = vmatprep.subr.mxu0 0.0
        %2701 = vmatpush1.msra.mxu0 0.0
        %2702 = vmatprep.subr.mxu0 0.0
        %2703 = vmatpush1.msra.mxu0 0.0
        %2704 = vmatprep.subr.mxu0 0.0
        %2705 = vmatpush1.msra.mxu0 0.0
        %2706 = vmatprep.mubr.f32.mxu0 0.0
        %v2707 = vand.u32 %v1034, 4294901760
        %2708 = vmatmul.mubr.f32.gmra.mrb[0].mxu0 %v2707
        %v2709 = vpop.f32.mrb[0].mxu0
        %v2710 = vadd.f32 %v2619, %v2709
        %v2711 = vpop.f32.mrb[0].mxu0
        %2712 = vmatprep.mubr.f32.mxu0 0.0
        %v2713 = vand.u32 %v1037, 4294901760
        %2714 = vmatmul.mubr.f32.gmra.mrb[0].mxu0 %v2713
        %v2715 = vpop.f32.mrb[0].mxu0
        %v2716 = vadd.f32 %v2629, %v2715
        %v2717 = vpop.f32.mrb[0].mxu0
        %2718 = vdwg.mxu0
        %2719 = vmatprep.subr.mxu0 0.0
        %v2720 = vand.u32 %v1021, 4294901760
        %v2721 = vsub.f32 %v1021, %v2720
        %2722 = vmatpush1.msra.mxu0 %v2721
        %2723 = vmatprep.subr.mxu0 0.0
        %v2724 = vand.u32 %v1027, 4294901760
        %v2725 = vsub.f32 %v1027, %v2724
        %2726 = vmatpush1.msra.mxu0 %v2725
        %2727 = vmatprep.subr.mxu0 0.0
        %2728 = vmatpush1.msra.mxu0 0.0
        %2729 = vmatprep.subr.mxu0 0.0
        %2730 = vmatpush1.msra.mxu0 0.0
        %2731 = vmatprep.subr.mxu0 0.0
        %2732 = vmatpush1.msra.mxu0 0.0
        %2733 = vmatprep.subr.mxu0 0.0
        %2734 = vmatpush1.msra.mxu0 0.0
        %2735 = vmatprep.subr.mxu0 0.0
        %2736 = vmatpush1.msra.mxu0 0.0
        %2737 = vmatprep.subr.mxu0 0.0
        %2738 = vmatpush1.msra.mxu0 0.0
        %2739 = vmatprep.subr.mxu0 0.0
        %2740 = vmatpush1.msra.mxu0 0.0
        %2741 = vmatprep.subr.mxu0 0.0
        %2742 = vmatpush1.msra.mxu0 0.0
        %2743 = vmatprep.subr.mxu0 0.0
        %2744 = vmatpush1.msra.mxu0 0.0
        %2745 = vmatprep.subr.mxu0 0.0
        %2746 = vmatpush1.msra.mxu0 0.0
        %2747 = vmatprep.subr.mxu0 0.0
        %2748 = vmatpush1.msra.mxu0 0.0
        %2749 = vmatprep.subr.mxu0 0.0
        %2750 = vmatpush1.msra.mxu0 0.0
        %2751 = vmatprep.subr.mxu0 0.0
        %2752 = vmatpush1.msra.mxu0 0.0
        %2753 = vmatprep.subr.mxu0 0.0
        %2754 = vmatpush1.msra.mxu0 0.0
        %2755 = vmatprep.subr.mxu0 0.0
        %2756 = vmatpush1.msra.mxu0 0.0
        %2757 = vmatprep.subr.mxu0 0.0
        %2758 = vmatpush1.msra.mxu0 0.0
        %2759 = vmatprep.subr.mxu0 0.0
        %2760 = vmatpush1.msra.mxu0 0.0
        %2761 = vmatprep.subr.mxu0 0.0
        %2762 = vmatpush1.msra.mxu0 0.0
        %2763 = vmatprep.subr.mxu0 0.0
        %2764 = vmatpush1.msra.mxu0 0.0
        %2765 = vmatprep.subr.mxu0 0.0
        %2766 = vmatpush1.msra.mxu0 0.0
        %2767 = vmatprep.subr.mxu0 0.0
        %2768 = vmatpush1.msra.mxu0 0.0
        %2769 = vmatprep.subr.mxu0 0.0
        %2770 = vmatpush1.msra.mxu0 0.0
        %2771 = vmatprep.subr.mxu0 0.0
        %2772 = vmatpush1.msra.mxu0 0.0
        %2773 = vmatprep.subr.mxu0 0.0
        %2774 = vmatpush1.msra.mxu0 0.0
        %2775 = vmatprep.subr.mxu0 0.0
        %2776 = vmatpush1.msra.mxu0 0.0
        %2777 = vmatprep.subr.mxu0 0.0
        %2778 = vmatpush1.msra.mxu0 0.0
        %2779 = vmatprep.subr.mxu0 0.0
        %2780 = vmatpush1.msra.mxu0 0.0
        %2781 = vmatprep.subr.mxu0 0.0
        %2782 = vmatpush1.msra.mxu0 0.0
        %2783 = vmatprep.subr.mxu0 0.0
        %2784 = vmatpush1.msra.mxu0 0.0
        %2785 = vmatprep.subr.mxu0 0.0
        %2786 = vmatpush1.msra.mxu0 0.0
        %2787 = vmatprep.mubr.f32.mxu0 0.0
        %v2788 = vand.u32 %v1034, 4294901760
        %v2789 = vsub.f32 %v1034, %v2788
        %2790 = vmatmul.mubr.f32.gmra.mrb[0].mxu0 %v2789
        %v2791 = vpop.f32.mrb[0].mxu0
        %v2792 = vadd.f32 %v2710, %v2791
        %v2793 = vpop.f32.mrb[0].mxu0
        %2794 = vmatprep.mubr.f32.mxu0 0.0
        %v2795 = vand.u32 %v1037, 4294901760
        %v2796 = vsub.f32 %v1037, %v2795
        %2797 = vmatmul.mubr.f32.gmra.mrb[0].mxu0 %v2796
        %v2798 = vpop.f32.mrb[0].mxu0
        %v2799 = vadd.f32 %v2716, %v2798
        %v2800 = vpop.f32.mrb[0].mxu0
        %2801 = vdwg.mxu0
        %2802 = vmatprep.subr.mxu0 0.0
        %v2803 = vand.u32 %v1021, 4294901760
        %2804 = vmatpush1.msra.mxu0 %v2803
        %2805 = vmatprep.subr.mxu0 0.0
        %v2806 = vand.u32 %v1027, 4294901760
        %2807 = vmatpush1.msra.mxu0 %v2806
        %2808 = vmatprep.subr.mxu0 0.0
        %2809 = vmatpush1.msra.mxu0 0.0
        %2810 = vmatprep.subr.mxu0 0.0
        %2811 = vmatpush1.msra.mxu0 0.0
        %2812 = vmatprep.subr.mxu0 0.0
        %2813 = vmatpush1.msra.mxu0 0.0
        %2814 = vmatprep.subr.mxu0 0.0
        %2815 = vmatpush1.msra.mxu0 0.0
        %2816 = vmatprep.subr.mxu0 0.0
        %2817 = vmatpush1.msra.mxu0 0.0
        %2818 = vmatprep.subr.mxu0 0.0
        %2819 = vmatpush1.msra.mxu0 0.0
        %2820 = vmatprep.subr.mxu0 0.0
        %2821 = vmatpush1.msra.mxu0 0.0
        %2822 = vmatprep.subr.mxu0 0.0
        %2823 = vmatpush1.msra.mxu0 0.0
        %2824 = vmatprep.subr.mxu0 0.0
        %2825 = vmatpush1.msra.mxu0 0.0
        %2826 = vmatprep.subr.mxu0 0.0
        %2827 = vmatpush1.msra.mxu0 0.0
        %2828 = vmatprep.subr.mxu0 0.0
        %2829 = vmatpush1.msra.mxu0 0.0
        %2830 = vmatprep.subr.mxu0 0.0
        %2831 = vmatpush1.msra.mxu0 0.0
        %2832 = vmatprep.subr.mxu0 0.0
        %2833 = vmatpush1.msra.mxu0 0.0
        %2834 = vmatprep.subr.mxu0 0.0
        %2835 = vmatpush1.msra.mxu0 0.0
        %2836 = vmatprep.subr.mxu0 0.0
        %2837 = vmatpush1.msra.mxu0 0.0
        %2838 = vmatprep.subr.mxu0 0.0
        %2839 = vmatpush1.msra.mxu0 0.0
        %2840 = vmatprep.subr.mxu0 0.0
        %2841 = vmatpush1.msra.mxu0 0.0
        %2842 = vmatprep.subr.mxu0 0.0
        %2843 = vmatpush1.msra.mxu0 0.0
        %2844 = vmatprep.subr.mxu0 0.0
        %2845 = vmatpush1.msra.mxu0 0.0
        %2846 = vmatprep.subr.mxu0 0.0
        %2847 = vmatpush1.msra.mxu0 0.0
        %2848 = vmatprep.subr.mxu0 0.0
        %2849 = vmatpush1.msra.mxu0 0.0
        %2850 = vmatprep.subr.mxu0 0.0
        %2851 = vmatpush1.msra.mxu0 0.0
        %2852 = vmatprep.subr.mxu0 0.0
        %2853 = vmatpush1.msra.mxu0 0.0
        %2854 = vmatprep.subr.mxu0 0.0
        %2855 = vmatpush1.msra.mxu0 0.0
        %2856 = vmatprep.subr.mxu0 0.0
        %2857 = vmatpush1.msra.mxu0 0.0
        %2858 = vmatprep.subr.mxu0 0.0
        %2859 = vmatpush1.msra.mxu0 0.0
        %2860 = vmatprep.subr.mxu0 0.0
        %2861 = vmatpush1.msra.mxu0 0.0
        %2862 = vmatprep.subr.mxu0 0.0
        %2863 = vmatpush1.msra.mxu0 0.0
        %2864 = vmatprep.subr.mxu0 0.0
        %2865 = vmatpush1.msra.mxu0 0.0
        %2866 = vmatprep.subr.mxu0 0.0
        %2867 = vmatpush1.msra.mxu0 0.0
        %2868 = vmatprep.mubr.f32.mxu0 0.0
        %v2869 = vand.u32 %v1034, 4294901760
        %v2870 = vsub.f32 %v1034, %v2869
        %v2871 = vand.u32 %v2870, 4294901760
        %2872 = vmatmul.mubr.f32.gmra.mrb[0].mxu0 %v2871
        %v2873 = vpop.f32.mrb[0].mxu0
        %v2874 = vadd.f32 %v2792, %v2873
        %v2875 = vpop.f32.mrb[0].mxu0
        %2876 = vmatprep.mubr.f32.mxu0 0.0
        %v2877 = vand.u32 %v1037, 4294901760
        %v2878 = vsub.f32 %v1037, %v2877
        %v2879 = vand.u32 %v2878, 4294901760
        %2880 = vmatmul.mubr.f32.gmra.mrb[0].mxu0 %v2879
        %v2881 = vpop.f32.mrb[0].mxu0
        %v2882 = vadd.f32 %v2799, %v2881
        %v2883 = vpop.f32.mrb[0].mxu0
        %2884 = vdwg.mxu0
        %2885 = vmatprep.subr.mxu0 0.0
        %v2886 = vand.u32 %v1021, 4294901760
        %v2887 = vsub.f32 %v1021, %v2886
        %v2888 = vand.u32 %v2887, 4294901760
        %2889 = vmatpush1.msra.mxu0 %v2888
        %2890 = vmatprep.subr.mxu0 0.0
        %v2891 = vand.u32 %v1027, 4294901760
        %v2892 = vsub.f32 %v1027, %v2891
        %v2893 = vand.u32 %v2892, 4294901760
        %2894 = vmatpush1.msra.mxu0 %v2893
        %2895 = vmatprep.subr.mxu0 0.0
        %2896 = vmatpush1.msra.mxu0 0.0
        %2897 = vmatprep.subr.mxu0 0.0
        %2898 = vmatpush1.msra.mxu0 0.0
        %2899 = vmatprep.subr.mxu0 0.0
        %2900 = vmatpush1.msra.mxu0 0.0
        %2901 = vmatprep.subr.mxu0 0.0
        %2902 = vmatpush1.msra.mxu0 0.0
        %2903 = vmatprep.subr.mxu0 0.0
        %2904 = vmatpush1.msra.mxu0 0.0
        %2905 = vmatprep.subr.mxu0 0.0
        %2906 = vmatpush1.msra.mxu0 0.0
        %2907 = vmatprep.subr.mxu0 0.0
        %2908 = vmatpush1.msra.mxu0 0.0
        %2909 = vmatprep.subr.mxu0 0.0
        %2910 = vmatpush1.msra.mxu0 0.0
        %2911 = vmatprep.subr.mxu0 0.0
        %2912 = vmatpush1.msra.mxu0 0.0
        %2913 = vmatprep.subr.mxu0 0.0
        %2914 = vmatpush1.msra.mxu0 0.0
        %2915 = vmatprep.subr.mxu0 0.0
        %2916 = vmatpush1.msra.mxu0 0.0
        %2917 = vmatprep.subr.mxu0 0.0
        %2918 = vmatpush1.msra.mxu0 0.0
        %2919 = vmatprep.subr.mxu0 0.0
        %2920 = vmatpush1.msra.mxu0 0.0
        %2921 = vmatprep.subr.mxu0 0.0
        %2922 = vmatpush1.msra.mxu0 0.0
        %2923 = vmatprep.subr.mxu0 0.0
        %2924 = vmatpush1.msra.mxu0 0.0
        %2925 = vmatprep.subr.mxu0 0.0
        %2926 = vmatpush1.msra.mxu0 0.0
        %2927 = vmatprep.subr.mxu0 0.0
        %2928 = vmatpush1.msra.mxu0 0.0
        %2929 = vmatprep.subr.mxu0 0.0
        %2930 = vmatpush1.msra.mxu0 0.0
        %2931 = vmatprep.subr.mxu0 0.0
        %2932 = vmatpush1.msra.mxu0 0.0
        %2933 = vmatprep.subr.mxu0 0.0
        %2934 = vmatpush1.msra.mxu0 0.0
        %2935 = vmatprep.subr.mxu0 0.0
        %2936 = vmatpush1.msra.mxu0 0.0
        %2937 = vmatprep.subr.mxu0 0.0
        %2938 = vmatpush1.msra.mxu0 0.0
        %2939 = vmatprep.subr.mxu0 0.0
        %2940 = vmatpush1.msra.mxu0 0.0
        %2941 = vmatprep.subr.mxu0 0.0
        %2942 = vmatpush1.msra.mxu0 0.0
        %2943 = vmatprep.subr.mxu0 0.0
        %2944 = vmatpush1.msra.mxu0 0.0
        %2945 = vmatprep.subr.mxu0 0.0
        %2946 = vmatpush1.msra.mxu0 0.0
        %2947 = vmatprep.subr.mxu0 0.0
        %2948 = vmatpush1.msra.mxu0 0.0
        %2949 = vmatprep.subr.mxu0 0.0
        %2950 = vmatpush1.msra.mxu0 0.0
        %2951 = vmatprep.subr.mxu0 0.0
        %2952 = vmatpush1.msra.mxu0 0.0
        %2953 = vmatprep.subr.mxu0 0.0
        %2954 = vmatpush1.msra.mxu0 0.0
        %2955 = vmatprep.mubr.f32.mxu0 0.0
        %v2956 = vand.u32 %v1034, 4294901760
        %2957 = vmatmul.mubr.f32.gmra.mrb[0].mxu0 %v2956
        %v2958 = vpop.f32.mrb[0].mxu0
        %v2959 = vadd.f32 %v2874, %v2958
        %v2960 = vpop.f32.mrb[0].mxu0
        %2961 = vmatprep.mubr.f32.mxu0 0.0
        %v2962 = vand.u32 %v1037, 4294901760
        %2963 = vmatmul.mubr.f32.gmra.mrb[0].mxu0 %v2962
        %v2964 = vpop.f32.mrb[0].mxu0
        %v2965 = vadd.f32 %v2882, %v2964
        %v2966 = vpop.f32.mrb[0].mxu0
        %2967 = vdwg.mxu0
        %2968 = vmatprep.subr.mxu0 0.0
        %v2969 = vand.u32 %v1021, 4294901760
        %2970 = vmatpush1.msra.mxu0 %v2969
        %2971 = vmatprep.subr.mxu0 0.0
        %v2972 = vand.u32 %v1027, 4294901760
        %2973 = vmatpush1.msra.mxu0 %v2972
        %2974 = vmatprep.subr.mxu0 0.0
        %2975 = vmatpush1.msra.mxu0 0.0
        %2976 = vmatprep.subr.mxu0 0.0
        %2977 = vmatpush1.msra.mxu0 0.0
        %2978 = vmatprep.subr.mxu0 0.0
        %2979 = vmatpush1.msra.mxu0 0.0
        %2980 = vmatprep.subr.mxu0 0.0
        %2981 = vmatpush1.msra.mxu0 0.0
        %2982 = vmatprep.subr.mxu0 0.0
        %2983 = vmatpush1.msra.mxu0 0.0
        %2984 = vmatprep.subr.mxu0 0.0
        %2985 = vmatpush1.msra.mxu0 0.0
        %2986 = vmatprep.subr.mxu0 0.0
        %2987 = vmatpush1.msra.mxu0 0.0
        %2988 = vmatprep.subr.mxu0 0.0
        %2989 = vmatpush1.msra.mxu0 0.0
        %2990 = vmatprep.subr.mxu0 0.0
        %2991 = vmatpush1.msra.mxu0 0.0
        %2992 = vmatprep.subr.mxu0 0.0
        %2993 = vmatpush1.msra.mxu0 0.0
        %2994 = vmatprep.subr.mxu0 0.0
        %2995 = vmatpush1.msra.mxu0 0.0
        %2996 = vmatprep.subr.mxu0 0.0
        %2997 = vmatpush1.msra.mxu0 0.0
        %2998 = vmatprep.subr.mxu0 0.0
        %2999 = vmatpush1.msra.mxu0 0.0
        %3000 = vmatprep.subr.mxu0 0.0
        %3001 = vmatpush1.msra.mxu0 0.0
        %3002 = vmatprep.subr.mxu0 0.0
        %3003 = vmatpush1.msra.mxu0 0.0
        %3004 = vmatprep.subr.mxu0 0.0
        %3005 = vmatpush1.msra.mxu0 0.0
        %3006 = vmatprep.subr.mxu0 0.0
        %3007 = vmatpush1.msra.mxu0 0.0
        %3008 = vmatprep.subr.mxu0 0.0
        %3009 = vmatpush1.msra.mxu0 0.0
        %3010 = vmatprep.subr.mxu0 0.0
        %3011 = vmatpush1.msra.mxu0 0.0
        %3012 = vmatprep.subr.mxu0 0.0
        %3013 = vmatpush1.msra.mxu0 0.0
        %3014 = vmatprep.subr.mxu0 0.0
        %3015 = vmatpush1.msra.mxu0 0.0
        %3016 = vmatprep.subr.mxu0 0.0
        %3017 = vmatpush1.msra.mxu0 0.0
        %3018 = vmatprep.subr.mxu0 0.0
        %3019 = vmatpush1.msra.mxu0 0.0
        %3020 = vmatprep.subr.mxu0 0.0
        %3021 = vmatpush1.msra.mxu0 0.0
        %3022 = vmatprep.subr.mxu0 0.0
        %3023 = vmatpush1.msra.mxu0 0.0
        %3024 = vmatprep.subr.mxu0 0.0
        %3025 = vmatpush1.msra.mxu0 0.0
        %3026 = vmatprep.subr.mxu0 0.0
        %3027 = vmatpush1.msra.mxu0 0.0
        %3028 = vmatprep.subr.mxu0 0.0
        %3029 = vmatpush1.msra.mxu0 0.0
        %3030 = vmatprep.subr.mxu0 0.0
        %3031 = vmatpush1.msra.mxu0 0.0
        %3032 = vmatprep.subr.mxu0 0.0
        %3033 = vmatpush1.msra.mxu0 0.0
        %3034 = vmatprep.mubr.f32.mxu0 0.0
        %v3035 = vand.u32 %v1034, 4294901760
        %3036 = vmatmul.mubr.f32.gmra.mrb[0].mxu0 %v3035
        %v3037 = vpop.f32.mrb[0].mxu0
        %v3038 = vadd.f32 %v2959, %v3037
        %v3039 = vpop.f32.mrb[0].mxu0
        %3040 = vmatprep.mubr.f32.mxu0 0.0
        %v3041 = vand.u32 %v1037, 4294901760
        %3042 = vmatmul.mubr.f32.gmra.mrb[0].mxu0 %v3041
        %v3043 = vpop.f32.mrb[0].mxu0
        %v3044 = vadd.f32 %v2965, %v3043
        %v3045 = vpop.f32.mrb[0].mxu0
        %3046 = vdwg.mxu0
        %3047 = vst [vmem:[%s218] sm:$0xff] %v1532
        %3048 = vst [vmem:[%s218 + $0x8] sm:$0xff] %v1538
        %3049 = vst [vmem:[%s218 + $0x10] sm:$0xff] %v2034
        %3050 = vst [vmem:[%s218 + $0x18] sm:$0xff] %v2040
        %3051 = vst [vmem:[%s218 + $0x20] sm:$0xff] %v2536
        %3052 = vst [vmem:[%s218 + $0x28] sm:$0xff] %v2542
        %3053 = vst [vmem:[%s218 + $0x30] sm:$0xff] %v3038
        %3054 = vst [vmem:[%s218 + $0x38] sm:$0xff] %v3044
        %s3055 = sand.u32 %s97, 1
        %s3056 = scalar_lea.sflag [#allocation4], %s3055
        %s3057 = sand.u32 %s97, 1
        %s3058 = smul.addr %s3057, 64
        %s3059 = scalar_lea.vmem [#allocation8], %s3058
        // Predicated region
        $region45: #{tpu_custom_call.1} parent=31 // pred_check
          %p3060 = pneg %p107
        $region46: #{tpu_custom_call.1} parent=31 // pred_check_branch
          %3062 = sbr.rel (%p3060) target = $region48
        $region47: #{tpu_custom_call.1} parent=31 // pred_region
          %s3063 = smul.u32 4, %s21
          %s3065 = ssub.s32 1024, 1024
          %3066 = vsyncadd %s3056, %s3065
          %s3067 = smul.addr %s3063, 2
          %s3068 = smul.addr %s3067, 128
          %s3069 = scalar_lea.hbm %s3, %s3068
          %s3070 = sshll.u32 %s3059, 4
          %s3071 = int_to_ptr.vmem [resolvable:$true] %s3070
          %3076 = dma.vmem_to_hbm [thread:$0]  %s3071, 1024, %s3069, %s3056, 128, 128, 8
        $region48: #{tpu_custom_call.1} parent=31 // pred_fallthru
          _
      $region32: #{tpu_custom_call.1} parent=5 // pred_fallthru
        _
      %p3077 = scmp.le.s32.totalorder 2, %s16
      // Predicated region
      $region49: #{tpu_custom_call.1} parent=5 // pred_check
        %p3078 = pneg %p3077
      $region50: #{tpu_custom_call.1} parent=5 // pred_check_branch
        %3080 = sbr.rel (%p3078) target = $region52
      $region51: #{tpu_custom_call.1} parent=5 // pred_region
        %s3081 = ssub.s32 %s16, 2
        // Predicated region
        $region53: #{tpu_custom_call.1} parent=51 // pred_check
          %p3082 = pneg %p113
        $region54: #{tpu_custom_call.1} parent=51 // pred_check_branch
          %3084 = sbr.rel (%p3082) target = $region56
        $region55: #{tpu_custom_call.1} parent=51 // pred_region
          %s3085 = sand.u32 %s98, 1
          %s3086 = scalar_lea.sflag [#allocation4], %s3085
          %s3087 = sand.u32 %s98, 1
          %s3088 = smul.addr %s3087, 64
          %s3089 = scalar_lea.vmem [#allocation8], %s3088
          %3090 = dma.done %s3086, 1024
        $region56: #{tpu_custom_call.1} parent=51 // pred_fallthru
          _
      $region52: #{tpu_custom_call.1} parent=5 // pred_fallthru
        _
    $region6: #{tpu_custom_call.1} parent=1 // loop_footer
      %s20 = sadd.s32 1, %s16
    $region7: #{tpu_custom_call.1} parent=1 // loop_footer_branch
      %15 = sbr.rel target = $region3
    $region8: #{tpu_custom_call.1} parent=1 // loop_exit
      _
    %3091 = vsyncpa [#allocation3], 1
    %s3092 = scalar_lea.sflag [#allocation3], 1
    %3093 = vsyncpa %s3092, 1
    %3094 = vsyncpa [#allocation6], 1
    %3095 = vsyncpa [#allocation4], 1
    %s3096 = scalar_lea.sflag [#allocation4], 1
    %3097 = vsyncpa %s3096, 1

</llo_original>
